<compile_context>
chip_gen: v7x
topology: tpu7x:2x2x1
jax: 0.10.0
libtpu: 0.0.40
codegen_flags: <defaults>
</compile_context>

<pallas_src>
import jax
import jax.numpy as jnp
import numpy as np
from jax.experimental import pallas as pl
from jax.experimental.pallas import tpu as pltpu

EPS = 1e-5
C1, C2, C3, F1 = 16, 32, 64, 128   # channel widths fixed by the module spec
SEG = 128                          # packed-bias segment stride (lane aligned)


# ----------------------------------------------------------------------------
# Pallas kernel: conv(k=3,p=1)+BN+ReLU x3  ->  flatten  ->  fc1+ReLU  ->  fc2
# Activations are (L*TB, C): row = l*TB + b (position-major), channels on lanes.
# ----------------------------------------------------------------------------
def cnn_kernel(x_ref, w1_ref, w2_ref, w3_ref, b_ref, wf1_ref, wf2_ref, out_ref):
    L, TB = x_ref.shape[0], x_ref.shape[1]
    BLT = L * TB
    NP = out_ref.shape[1]                        # padded (lane-dense) output width

    # packed per-channel biases (f32), 128-lane segments
    b1 = b_ref[:, 0:C1]
    b2 = b_ref[:, SEG:SEG + C2]
    b3 = b_ref[:, 2 * SEG:2 * SEG + C3]
    bf1 = b_ref[:, 3 * SEG:3 * SEG + F1]
    bf2 = b_ref[:, 4 * SEG:4 * SEG + NP]

    # Boundary masks for the pad=1 conv: whole TB-row blocks (never mixes batch
    # elements, since a roll by +-TB keeps the same b within each l block).
    row = jax.lax.broadcasted_iota(jnp.int32, (BLT, 1), 0)
    first = row < TB                             # rows with position l == 0
    last = row >= BLT - TB                       # rows with position l == L-1

    def shift_prev(v):                           # value at position l-1, zero at l == 0
        return jnp.where(first, 0.0, pltpu.roll(v, TB, axis=0))

    def shift_next(v):                           # value at position l+1, zero at l == L-1
        return jnp.where(last, 0.0, pltpu.roll(v, BLT - TB, axis=0))

    # ---- layer 1 (Cin == 1): pure VPU broadcast path, no MXU ----------------
    x2 = x_ref[...].reshape(BLT, 1)              # free view: lane dim unchanged
    w1 = w1_ref[...]                             # (3, 16) f32, BN scale folded
    h = jnp.maximum(shift_prev(x2) * w1[0:1, :]
                    + x2 * w1[1:2, :]
                    + shift_next(x2) * w1[2:3, :] + b1, 0.0)        # (BLT, 16)

    # ---- layers 2 & 3: three accumulating per-tap MXU dots (no im2col concat)
    # NOTE: shifts stay f32 (safe on v5e's f32-only VPU); bf16-before-shift is a
    # small extra win on v6e/v7x only.
    def conv_bn_relu(h_in, w_ref, bias):
        # w_ref: (3, Cin, Cout) bf16 with the BN scale folded in
        hm1 = shift_prev(h_in).astype(jnp.bfloat16)
        h0 = h_in.astype(jnp.bfloat16)
        hp1 = shift_next(h_in).astype(jnp.bfloat16)
        acc = jnp.dot(hm1, w_ref[0], preferred_element_type=jnp.float32)
        acc = acc + jnp.dot(h0, w_ref[1], preferred_element_type=jnp.float32)
        acc = acc + jnp.dot(hp1, w_ref[2], preferred_element_type=jnp.float32)
        return jnp.maximum(acc + bias, 0.0)

    h = conv_bn_relu(h, w2_ref, b2)              # (BLT, 32)
    h = conv_bn_relu(h, w3_ref, b3)              # (BLT, 64)

    # TODO(synk): Dropout(0.5) is identity in inference mode; training-mode RNG
    # masking is not implemented here.

    # ---- fc1: position-major flatten == L accumulating (TB,64)@(64,128) dots
    # (contiguous sublane slices of h; no (TB, L*64) relayout is ever built)
    hb = h.astype(jnp.bfloat16)
    z = jnp.zeros((TB, F1), jnp.float32)
    for l in range(L):                           # static unroll, L = input_size
        z = z + jnp.dot(hb[l * TB:(l + 1) * TB, :], wf1_ref[l],
                        preferred_element_type=jnp.float32)
    z = jnp.maximum(z + bf1, 0.0).astype(jnp.bfloat16)              # (TB, 128)

    # ---- fc2: lane-dense 128-wide padded output slab ------------------------
    out = jnp.dot(z, wf2_ref[...], preferred_element_type=jnp.float32) + bf2
    out_ref[...] = out.astype(out_ref.dtype)


# ----------------------------------------------------------------------------
# JAX glue: deterministic parameter init + pallas_call wrapper
# ----------------------------------------------------------------------------
def init_params(key, input_size, output_size=2):
    ks = jax.random.split(key, 16)
    p = {}
    i = 0
    for li, (cin, cout) in enumerate([(1, 16), (16, 32), (32, 64)], start=1):
        p[f'conv{li}_w'] = 0.1 * jax.random.normal(ks[i], (cout, cin, 3), jnp.float32); i += 1
        p[f'conv{li}_b'] = 0.1 * jax.random.normal(ks[i], (cout,), jnp.float32); i += 1
        p[f'bn{li}_g'] = 1.0 + 0.1 * jax.random.normal(ks[i], (cout,), jnp.float32); i += 1
        p[f'bn{li}_b'] = 0.1 * jax.random.normal(ks[i], (cout,), jnp.float32); i += 1
        p[f'bn{li}_m'] = jnp.zeros((cout,), jnp.float32)   # running_mean
        p[f'bn{li}_v'] = jnp.ones((cout,), jnp.float32)    # running_var
    p['fc1_w'] = 0.02 * jax.random.normal(ks[i], (128, 64 * input_size), jnp.float32); i += 1
    p['fc1_b'] = 0.02 * jax.random.normal(ks[i], (128,), jnp.float32); i += 1
    p['fc2_w'] = 0.02 * jax.random.normal(ks[i], (output_size, 128), jnp.float32); i += 1
    p['fc2_b'] = 0.02 * jax.random.normal(ks[i], (output_size,), jnp.float32); i += 1
    return p


def _fold_conv_bn(p, li):
    """Fold inference BatchNorm into the conv: (3, Cin, Cout) scale-folded weight
    plus the remaining per-channel bias (Cout,)."""
    scale = p[f'bn{li}_g'] / jnp.sqrt(p[f'bn{li}_v'] + EPS)
    w = jnp.transpose(p[f'conv{li}_w'], (2, 1, 0)) * scale[None, None, :]
    b = p[f'bn{li}_b'] + scale * (p[f'conv{li}_b'] - p[f'bn{li}_m'])
    return w, b


def _pick_batch_tile(B, batch_block):
    """Batch tile: multiple of 8 (sublane rule) or the full batch; for B >= 16
    guarantee >= 2 grid steps (v7x megacore) and cap at 512 rows (v6e/v5e)."""
    if batch_block is not None:
        TB = int(batch_block)
    elif B < 16:
        return B                                   # single step; block == full extent
    else:
        TB = min(512, max(8, (B // 2) // 8 * 8))
    if TB >= B:
        return B
    if TB % 8 != 0:
        TB = max(8, (TB // 8) * 8)                 # clamp invalid user-provided tiles
    return min(TB, B)


def _vmem_limit_bytes(TB, L):
    """Explicit, bounded scoped-VMEM budget (safe against v7x's 64 MiB physical)."""
    blt = TB * L
    weights = (3 * C1 * 4 + 3 * C1 * C2 * 2 + 3 * C2 * C3 * 2
               + 5 * SEG * 4 + L * C3 * F1 * 2 + F1 * SEG * 2)
    io = L * TB * 4 + TB * SEG * 4
    acts = blt * (1 + 2 * C1 + 2 * C2 + 2 * C3) * 4     # rough f32-equivalent live set
    est = 2 * (weights + io) + 2 * acts                 # double-buffered DMA + headroom
    return int(min(48 * 2 ** 20, max(32 * 2 ** 20, est)))


def cnn_forward_pallas(x, p, output_size=2, batch_block=None):
    B, L = x.shape
    # bias-packing / output-padding guard (each vector must fit a 128-lane segment)
    assert output_size <= SEG and F1 <= SEG, "bias packing assumes <=128-wide vectors"

    w1_3, b1 = _fold_conv_bn(p, 1)                       # (3, 1, 16)
    w2_3, b2 = _fold_conv_bn(p, 2)                       # (3, 16, 32)
    w3_3, b3 = _fold_conv_bn(p, 3)                       # (3, 32, 64)
    w1 = w1_3.reshape(3, C1).astype(jnp.float32)         # layer 1 stays on the VPU
    w2 = w2_3.astype(jnp.bfloat16)                       # per-tap (3, Cin, Cout)
    w3 = w3_3.astype(jnp.bfloat16)

    # fc1 repacked for the position-major layout: wf1[l, c, f] = fc1_w[f, c*L + l]
    wf1 = jnp.transpose(p['fc1_w'].reshape(F1, C3, L), (2, 1, 0)).astype(jnp.bfloat16)
    # fc2 padded to a lane-dense 128-wide output (extra columns are zero)
    wf2 = jnp.zeros((F1, SEG), jnp.float32).at[:, :output_size].set(p['fc2_w'].T)
    wf2 = wf2.astype(jnp.bfloat16)

    # Pack all bias vectors into one lane-aligned operand.
    def seg(v):
        return jnp.pad(v.astype(jnp.float32), (0, SEG - v.shape[0]))
    b_all = jnp.concatenate(
        [seg(b1), seg(b2), seg(b3), seg(p['fc1_b']), seg(p['fc2_b'])])[None, :]

    TB = _pick_batch_tile(B, batch_block)
    grid = (pl.cdiv(B, TB),)

    # Input pre-shaped position-major (L, B, 1): the kernel reshape to (L*TB, 1)
    # is then a pure view (input relayout hoisted to the wrapper / HBM side).
    x_pm = jnp.transpose(x.astype(jnp.float32), (1, 0))[:, :, None]

    const2 = lambda i: (0, 0)
    const3 = lambda i: (0, 0, 0)
    # NOTE: constant-index weight operands could be single-buffered
    # (pipeline_mode=pl.Buffered(1)) to save VMEM on v7x; irrelevant at L=16.
    in_specs = [
        pl.BlockSpec((L, TB, 1), lambda i: (0, i, 0)),
        pl.BlockSpec(w1.shape, const2),
        pl.BlockSpec(w2.shape, const3),
        pl.BlockSpec(w3.shape, const3),
        pl.BlockSpec(b_all.shape, const2),
        pl.BlockSpec(wf1.shape, const3),
        pl.BlockSpec(wf2.shape, const2),
    ]
    out_specs = pl.BlockSpec((TB, SEG), lambda i: (i, 0))

    out_pad = pl.pallas_call(
        cnn_kernel,
        out_shape=jax.ShapeDtypeStruct((B, SEG), jnp.float32),
        grid=grid,
        in_specs=in_specs,
        out_specs=out_specs,
        compiler_params=pltpu.CompilerParams(
            dimension_semantics=("parallel",),
            vmem_limit_bytes=_vmem_limit_bytes(TB, L),
        ),
    )(x_pm, w1, w2, w3, b_all, wf1, wf2)
    return out_pad[:, :output_size]


# ----------------------------------------------------------------------------
# Pure-JAX reference (mirrors the PyTorch NCL forward) for a correctness check
# ----------------------------------------------------------------------------
def cnn_forward_ref(x, p):
    h = x[:, None, :]                                              # (B, 1, L)
    for li in (1, 2, 3):
        w, b = p[f'conv{li}_w'], p[f'conv{li}_b']
        h = jax.lax.conv_general_dilated(h, w, window_strides=(1,),
                                         padding=((1, 1),),
                                         dimension_numbers=('NCH', 'OIH', 'NCH'))
        h = h + b[None, :, None]
        g, be = p[f'bn{li}_g'], p[f'bn{li}_b']
        m, v = p[f'bn{li}_m'], p[f'bn{li}_v']
        h = g[None, :, None] * (h - m[None, :, None]) / jnp.sqrt(v[None, :, None] + EPS) \
            + be[None, :, None]
        h = jnp.maximum(h, 0.0)
    hf = h.reshape(h.shape[0], -1)                                 # channel-major flatten
    z = jnp.maximum(hf @ p['fc1_w'].T + p['fc1_b'], 0.0)
    return z @ p['fc2_w'].T + p['fc2_b']


if __name__ == "__main__":
    B, INPUT_SIZE, OUTPUT_SIZE = 2, 16, 2
    key = jax.random.PRNGKey(0)
    k_param, k_x = jax.random.split(key)
    params = init_params(k_param, INPUT_SIZE, OUTPUT_SIZE)

    # toy shape from the spec (single grid step)
    x = jax.random.normal(k_x, (B, INPUT_SIZE), jnp.float32)
    out = jax.block_until_ready(cnn_forward_pallas(x, params, OUTPUT_SIZE))
    ref = jax.block_until_ready(cnn_forward_ref(x, params))
    # bf16 MXU operands (f32 accumulation) -> slightly widened tolerance
    np.testing.assert_allclose(np.asarray(out), np.asarray(ref), rtol=2e-2, atol=5e-3)

    # multi-step "parallel" grid path (B=24 -> TB=8, 3 steps) to exercise tiling
    xb = jax.random.normal(jax.random.PRNGKey(1), (24, INPUT_SIZE), jnp.float32)
    outb = jax.block_until_ready(cnn_forward_pallas(xb, params, OUTPUT_SIZE))
    refb = jax.block_until_ready(cnn_forward_ref(xb, params))
    np.testing.assert_allclose(np.asarray(outb), np.asarray(refb), rtol=2e-2, atol=5e-3)

    print("KERNEL_OK")
</pallas_src>

<mosaic_0001>
module attributes {stable_mosaic.version = 11 : i64} {
  func.func @cnn_kernel(%arg0: i32, %arg1: memref<16x2x1xf32, #tpu.memory_space<vmem>>, %arg2: memref<3x16xf32, #tpu.memory_space<vmem>>, %arg3: memref<3x16x32xbf16, #tpu.memory_space<vmem>>, %arg4: memref<3x32x64xbf16, #tpu.memory_space<vmem>>, %arg5: memref<1x640xf32, #tpu.memory_space<vmem>>, %arg6: memref<16x64x128xbf16, #tpu.memory_space<vmem>>, %arg7: memref<128x128xbf16, #tpu.memory_space<vmem>>, %arg8: memref<2x128xf32, #tpu.memory_space<vmem>>) attributes {dimension_semantics = [#tpu.dimension_semantics<parallel>], iteration_bounds = array<i64: 1>, scalar_prefetch = 0 : i64, scratch_operands = 0 : i64, tpu.core_type = #tpu.core_type<tc>, window_params = [{transform_indices = @transform_0, window_bounds = array<i64: 16, 2, 1>}, {pipeline_mode = #tpu.pipeline_mode<synchronous>, transform_indices = @transform_1, window_bounds = array<i64: 3, 16>}, {pipeline_mode = #tpu.pipeline_mode<synchronous>, transform_indices = @transform_2, window_bounds = array<i64: 3, 16, 32>}, {pipeline_mode = #tpu.pipeline_mode<synchronous>, transform_indices = @transform_3, window_bounds = array<i64: 3, 32, 64>}, {pipeline_mode = #tpu.pipeline_mode<synchronous>, transform_indices = @transform_4, window_bounds = array<i64: 1, 640>}, {pipeline_mode = #tpu.pipeline_mode<synchronous>, transform_indices = @transform_5, window_bounds = array<i64: 16, 64, 128>}, {pipeline_mode = #tpu.pipeline_mode<synchronous>, transform_indices = @transform_6, window_bounds = array<i64: 128, 128>}, {transform_indices = @transform_7, window_bounds = array<i64: 2, 128>}]} {
    %c0 = arith.constant 0 : index
    %c0_0 = arith.constant 0 : index
    %0 = vector.load %arg5[%c0, %c0_0] : memref<1x640xf32, #tpu.memory_space<vmem>>, vector<1x16xf32>
    %c0_1 = arith.constant 0 : index
    %c128 = arith.constant 128 : index
    %1 = vector.load %arg5[%c0_1, %c128] : memref<1x640xf32, #tpu.memory_space<vmem>>, vector<1x32xf32>
    %c0_2 = arith.constant 0 : index
    %c256 = arith.constant 256 : index
    %2 = vector.load %arg5[%c0_2, %c256] : memref<1x640xf32, #tpu.memory_space<vmem>>, vector<1x64xf32>
    %c0_3 = arith.constant 0 : index
    %c384 = arith.constant 384 : index
    %3 = vector.load %arg5[%c0_3, %c384] : memref<1x640xf32, #tpu.memory_space<vmem>>, vector<1x128xf32>
    %c0_4 = arith.constant 0 : index
    %c512 = arith.constant 512 : index
    %4 = vector.load %arg5[%c0_4, %c512] : memref<1x640xf32, #tpu.memory_space<vmem>>, vector<1x128xf32>
    %5 = tpu.iota {dimensions = array<i32: 0>} : vector<32x1xi32>
    %c2_i32 = arith.constant 2 : i32
    %6 = vector.broadcast %c2_i32 : i32 to vector<32x1xi32>
    %7 = arith.cmpi slt, %5, %6 : vector<32x1xi32>
    %c30_i32 = arith.constant 30 : i32
    %8 = vector.broadcast %c30_i32 : i32 to vector<32x1xi32>
    %9 = arith.cmpi sge, %5, %8 : vector<32x1xi32>
    %c0_5 = arith.constant 0 : index
    %c0_6 = arith.constant 0 : index
    %c0_7 = arith.constant 0 : index
    %10 = vector.load %arg1[%c0_5, %c0_6, %c0_7] : memref<16x2x1xf32, #tpu.memory_space<vmem>>, vector<16x2x1xf32>
    %11 = vector.shape_cast %10 : vector<16x2x1xf32> to vector<32x1xf32>
    %c0_8 = arith.constant 0 : index
    %c0_9 = arith.constant 0 : index
    %12 = vector.load %arg2[%c0_8, %c0_9] : memref<3x16xf32, #tpu.memory_space<vmem>>, vector<3x16xf32>
    %c2_i32_10 = arith.constant 2 : i32
    %13 = tpu.dynamic_rotate %11 by %c2_i32_10 dim 0 : vector<32x1xf32>, i32 -> vector<32x1xf32>
    %cst = arith.constant 0.000000e+00 : f32
    %14 = vector.broadcast %cst : f32 to vector<32x1xf32>
    %15 = arith.select %7, %14, %13 : vector<32x1xi1>, vector<32x1xf32>
    %16 = vector.extract_strided_slice %12 {offsets = [0, 0], sizes = [1, 16], strides = [1, 1]} : vector<3x16xf32> to vector<1x16xf32>
    %17 = vector.broadcast %15 : vector<32x1xf32> to vector<32x16xf32>
    %18 = vector.broadcast %16 : vector<1x16xf32> to vector<32x16xf32>
    %19 = arith.mulf %17, %18 : vector<32x16xf32>
    %20 = vector.extract_strided_slice %12 {offsets = [1, 0], sizes = [1, 16], strides = [1, 1]} : vector<3x16xf32> to vector<1x16xf32>
    %21 = vector.broadcast %11 : vector<32x1xf32> to vector<32x16xf32>
    %22 = vector.broadcast %20 : vector<1x16xf32> to vector<32x16xf32>
    %23 = arith.mulf %21, %22 : vector<32x16xf32>
    %24 = arith.addf %19, %23 : vector<32x16xf32>
    %c30_i32_11 = arith.constant 30 : i32
    %25 = tpu.dynamic_rotate %11 by %c30_i32_11 dim 0 : vector<32x1xf32>, i32 -> vector<32x1xf32>
    %cst_12 = arith.constant 0.000000e+00 : f32
    %26 = vector.broadcast %cst_12 : f32 to vector<32x1xf32>
    %27 = arith.select %9, %26, %25 : vector<32x1xi1>, vector<32x1xf32>
    %28 = vector.extract_strided_slice %12 {offsets = [2, 0], sizes = [1, 16], strides = [1, 1]} : vector<3x16xf32> to vector<1x16xf32>
    %29 = vector.broadcast %27 : vector<32x1xf32> to vector<32x16xf32>
    %30 = vector.broadcast %28 : vector<1x16xf32> to vector<32x16xf32>
    %31 = arith.mulf %29, %30 : vector<32x16xf32>
    %32 = arith.addf %24, %31 : vector<32x16xf32>
    %33 = vector.broadcast %0 : vector<1x16xf32> to vector<32x16xf32>
    %34 = arith.addf %32, %33 : vector<32x16xf32>
    %cst_13 = arith.constant 0.000000e+00 : f32
    %35 = vector.broadcast %cst_13 : f32 to vector<32x16xf32>
    %36 = arith.maximumf %34, %35 : vector<32x16xf32>
    %c2_i32_14 = arith.constant 2 : i32
    %37 = tpu.dynamic_rotate %36 by %c2_i32_14 dim 0 : vector<32x16xf32>, i32 -> vector<32x16xf32>
    %cst_15 = arith.constant 0.000000e+00 : f32
    %38 = vector.shape_cast %7 : vector<32x1xi1> to vector<32x1xi1>
    %39 = vector.broadcast %38 : vector<32x1xi1> to vector<32x16xi1>
    %40 = vector.broadcast %cst_15 : f32 to vector<32x16xf32>
    %41 = arith.select %39, %40, %37 : vector<32x16xi1>, vector<32x16xf32>
    %42 = arith.truncf %41 : vector<32x16xf32> to vector<32x16xbf16>
    %43 = arith.truncf %36 : vector<32x16xf32> to vector<32x16xbf16>
    %c30_i32_16 = arith.constant 30 : i32
    %44 = tpu.dynamic_rotate %36 by %c30_i32_16 dim 0 : vector<32x16xf32>, i32 -> vector<32x16xf32>
    %cst_17 = arith.constant 0.000000e+00 : f32
    %45 = vector.shape_cast %9 : vector<32x1xi1> to vector<32x1xi1>
    %46 = vector.broadcast %45 : vector<32x1xi1> to vector<32x16xi1>
    %47 = vector.broadcast %cst_17 : f32 to vector<32x16xf32>
    %48 = arith.select %46, %47, %44 : vector<32x16xi1>, vector<32x16xf32>
    %49 = arith.truncf %48 : vector<32x16xf32> to vector<32x16xbf16>
    %c0_18 = arith.constant 0 : index
    %c0_19 = arith.constant 0 : index
    %c0_20 = arith.constant 0 : index
    %50 = vector.load %arg3[%c0_18, %c0_19, %c0_20] : memref<3x16x32xbf16, #tpu.memory_space<vmem>>, vector<1x16x32xbf16>
    %51 = vector.shape_cast %50 : vector<1x16x32xbf16> to vector<16x32xbf16>
    %cst_21 = arith.constant dense<0.000000e+00> : vector<32x32xf32>
    %52 = tpu.matmul %42, %51, %cst_21 {dimension_numbers = #tpu.dot_dimension_numbers<[1], [0], [0], [1], [0, 0, 1, 1], [], []>} : vector<32x16xbf16>, vector<16x32xbf16>, vector<32x32xf32> -> vector<32x32xf32>
    %c1 = arith.constant 1 : index
    %c0_22 = arith.constant 0 : index
    %c0_23 = arith.constant 0 : index
    %53 = vector.load %arg3[%c1, %c0_22, %c0_23] : memref<3x16x32xbf16, #tpu.memory_space<vmem>>, vector<1x16x32xbf16>
    %54 = vector.shape_cast %53 : vector<1x16x32xbf16> to vector<16x32xbf16>
    %cst_24 = arith.constant dense<0.000000e+00> : vector<32x32xf32>
    %55 = tpu.matmul %43, %54, %cst_24 {dimension_numbers = #tpu.dot_dimension_numbers<[1], [0], [0], [1], [0, 0, 1, 1], [], []>} : vector<32x16xbf16>, vector<16x32xbf16>, vector<32x32xf32> -> vector<32x32xf32>
    %56 = arith.addf %52, %55 : vector<32x32xf32>
    %c2 = arith.constant 2 : index
    %c0_25 = arith.constant 0 : index
    %c0_26 = arith.constant 0 : index
    %57 = vector.load %arg3[%c2, %c0_25, %c0_26] : memref<3x16x32xbf16, #tpu.memory_space<vmem>>, vector<1x16x32xbf16>
    %58 = vector.shape_cast %57 : vector<1x16x32xbf16> to vector<16x32xbf16>
    %cst_27 = arith.constant dense<0.000000e+00> : vector<32x32xf32>
    %59 = tpu.matmul %49, %58, %cst_27 {dimension_numbers = #tpu.dot_dimension_numbers<[1], [0], [0], [1], [0, 0, 1, 1], [], []>} : vector<32x16xbf16>, vector<16x32xbf16>, vector<32x32xf32> -> vector<32x32xf32>
    %60 = arith.addf %56, %59 : vector<32x32xf32>
    %61 = vector.broadcast %1 : vector<1x32xf32> to vector<32x32xf32>
    %62 = arith.addf %60, %61 : vector<32x32xf32>
    %cst_28 = arith.constant 0.000000e+00 : f32
    %63 = vector.broadcast %cst_28 : f32 to vector<32x32xf32>
    %64 = arith.maximumf %62, %63 : vector<32x32xf32>
    %c2_i32_29 = arith.constant 2 : i32
    %65 = tpu.dynamic_rotate %64 by %c2_i32_29 dim 0 : vector<32x32xf32>, i32 -> vector<32x32xf32>
    %cst_30 = arith.constant 0.000000e+00 : f32
    %66 = vector.shape_cast %7 : vector<32x1xi1> to vector<32x1xi1>
    %67 = vector.broadcast %66 : vector<32x1xi1> to vector<32x32xi1>
    %68 = vector.broadcast %cst_30 : f32 to vector<32x32xf32>
    %69 = arith.select %67, %68, %65 : vector<32x32xi1>, vector<32x32xf32>
    %70 = arith.truncf %69 : vector<32x32xf32> to vector<32x32xbf16>
    %71 = arith.truncf %64 : vector<32x32xf32> to vector<32x32xbf16>
    %c30_i32_31 = arith.constant 30 : i32
    %72 = tpu.dynamic_rotate %64 by %c30_i32_31 dim 0 : vector<32x32xf32>, i32 -> vector<32x32xf32>
    %cst_32 = arith.constant 0.000000e+00 : f32
    %73 = vector.shape_cast %9 : vector<32x1xi1> to vector<32x1xi1>
    %74 = vector.broadcast %73 : vector<32x1xi1> to vector<32x32xi1>
    %75 = vector.broadcast %cst_32 : f32 to vector<32x32xf32>
    %76 = arith.select %74, %75, %72 : vector<32x32xi1>, vector<32x32xf32>
    %77 = arith.truncf %76 : vector<32x32xf32> to vector<32x32xbf16>
    %c0_33 = arith.constant 0 : index
    %c0_34 = arith.constant 0 : index
    %c0_35 = arith.constant 0 : index
    %78 = vector.load %arg4[%c0_33, %c0_34, %c0_35] : memref<3x32x64xbf16, #tpu.memory_space<vmem>>, vector<1x32x64xbf16>
    %79 = vector.shape_cast %78 : vector<1x32x64xbf16> to vector<32x64xbf16>
    %cst_36 = arith.constant dense<0.000000e+00> : vector<32x64xf32>
    %80 = tpu.matmul %70, %79, %cst_36 {dimension_numbers = #tpu.dot_dimension_numbers<[1], [0], [0], [1], [0, 0, 1, 1], [], []>} : vector<32x32xbf16>, vector<32x64xbf16>, vector<32x64xf32> -> vector<32x64xf32>
    %c1_37 = arith.constant 1 : index
    %c0_38 = arith.constant 0 : index
    %c0_39 = arith.constant 0 : index
    %81 = vector.load %arg4[%c1_37, %c0_38, %c0_39] : memref<3x32x64xbf16, #tpu.memory_space<vmem>>, vector<1x32x64xbf16>
    %82 = vector.shape_cast %81 : vector<1x32x64xbf16> to vector<32x64xbf16>
    %cst_40 = arith.constant dense<0.000000e+00> : vector<32x64xf32>
    %83 = tpu.matmul %71, %82, %cst_40 {dimension_numbers = #tpu.dot_dimension_numbers<[1], [0], [0], [1], [0, 0, 1, 1], [], []>} : vector<32x32xbf16>, vector<32x64xbf16>, vector<32x64xf32> -> vector<32x64xf32>
    %84 = arith.addf %80, %83 : vector<32x64xf32>
    %c2_41 = arith.constant 2 : index
    %c0_42 = arith.constant 0 : index
    %c0_43 = arith.constant 0 : index
    %85 = vector.load %arg4[%c2_41, %c0_42, %c0_43] : memref<3x32x64xbf16, #tpu.memory_space<vmem>>, vector<1x32x64xbf16>
    %86 = vector.shape_cast %85 : vector<1x32x64xbf16> to vector<32x64xbf16>
    %cst_44 = arith.constant dense<0.000000e+00> : vector<32x64xf32>
    %87 = tpu.matmul %77, %86, %cst_44 {dimension_numbers = #tpu.dot_dimension_numbers<[1], [0], [0], [1], [0, 0, 1, 1], [], []>} : vector<32x32xbf16>, vector<32x64xbf16>, vector<32x64xf32> -> vector<32x64xf32>
    %88 = arith.addf %84, %87 : vector<32x64xf32>
    %89 = vector.broadcast %2 : vector<1x64xf32> to vector<32x64xf32>
    %90 = arith.addf %88, %89 : vector<32x64xf32>
    %cst_45 = arith.constant 0.000000e+00 : f32
    %91 = vector.broadcast %cst_45 : f32 to vector<32x64xf32>
    %92 = arith.maximumf %90, %91 : vector<32x64xf32>
    %93 = arith.truncf %92 : vector<32x64xf32> to vector<32x64xbf16>
    %cst_46 = arith.constant 0.000000e+00 : f32
    %94 = vector.broadcast %cst_46 : f32 to vector<2x128xf32>
    %95 = vector.extract_strided_slice %93 {offsets = [0, 0], sizes = [2, 64], strides = [1, 1]} : vector<32x64xbf16> to vector<2x64xbf16>
    %c0_47 = arith.constant 0 : index
    %c0_48 = arith.constant 0 : index
    %c0_49 = arith.constant 0 : index
    %96 = vector.load %arg6[%c0_47, %c0_48, %c0_49] : memref<16x64x128xbf16, #tpu.memory_space<vmem>>, vector<1x64x128xbf16>
    %97 = vector.shape_cast %96 : vector<1x64x128xbf16> to vector<64x128xbf16>
    %cst_50 = arith.constant dense<0.000000e+00> : vector<2x128xf32>
    %98 = tpu.matmul %95, %97, %cst_50 {dimension_numbers = #tpu.dot_dimension_numbers<[1], [0], [0], [1], [0, 0, 1, 1], [], []>} : vector<2x64xbf16>, vector<64x128xbf16>, vector<2x128xf32> -> vector<2x128xf32>
    %99 = arith.addf %94, %98 : vector<2x128xf32>
    %100 = vector.extract_strided_slice %93 {offsets = [2, 0], sizes = [2, 64], strides = [1, 1]} : vector<32x64xbf16> to vector<2x64xbf16>
    %c1_51 = arith.constant 1 : index
    %c0_52 = arith.constant 0 : index
    %c0_53 = arith.constant 0 : index
    %101 = vector.load %arg6[%c1_51, %c0_52, %c0_53] : memref<16x64x128xbf16, #tpu.memory_space<vmem>>, vector<1x64x128xbf16>
    %102 = vector.shape_cast %101 : vector<1x64x128xbf16> to vector<64x128xbf16>
    %cst_54 = arith.constant dense<0.000000e+00> : vector<2x128xf32>
    %103 = tpu.matmul %100, %102, %cst_54 {dimension_numbers = #tpu.dot_dimension_numbers<[1], [0], [0], [1], [0, 0, 1, 1], [], []>} : vector<2x64xbf16>, vector<64x128xbf16>, vector<2x128xf32> -> vector<2x128xf32>
    %104 = arith.addf %99, %103 : vector<2x128xf32>
    %105 = vector.extract_strided_slice %93 {offsets = [4, 0], sizes = [2, 64], strides = [1, 1]} : vector<32x64xbf16> to vector<2x64xbf16>
    %c2_55 = arith.constant 2 : index
    %c0_56 = arith.constant 0 : index
    %c0_57 = arith.constant 0 : index
    %106 = vector.load %arg6[%c2_55, %c0_56, %c0_57] : memref<16x64x128xbf16, #tpu.memory_space<vmem>>, vector<1x64x128xbf16>
    %107 = vector.shape_cast %106 : vector<1x64x128xbf16> to vector<64x128xbf16>
    %cst_58 = arith.constant dense<0.000000e+00> : vector<2x128xf32>
    %108 = tpu.matmul %105, %107, %cst_58 {dimension_numbers = #tpu.dot_dimension_numbers<[1], [0], [0], [1], [0, 0, 1, 1], [], []>} : vector<2x64xbf16>, vector<64x128xbf16>, vector<2x128xf32> -> vector<2x128xf32>
    %109 = arith.addf %104, %108 : vector<2x128xf32>
    %110 = vector.extract_strided_slice %93 {offsets = [6, 0], sizes = [2, 64], strides = [1, 1]} : vector<32x64xbf16> to vector<2x64xbf16>
    %c3 = arith.constant 3 : index
    %c0_59 = arith.constant 0 : index
    %c0_60 = arith.constant 0 : index
    %111 = vector.load %arg6[%c3, %c0_59, %c0_60] : memref<16x64x128xbf16, #tpu.memory_space<vmem>>, vector<1x64x128xbf16>
    %112 = vector.shape_cast %111 : vector<1x64x128xbf16> to vector<64x128xbf16>
    %cst_61 = arith.constant dense<0.000000e+00> : vector<2x128xf32>
    %113 = tpu.matmul %110, %112, %cst_61 {dimension_numbers = #tpu.dot_dimension_numbers<[1], [0], [0], [1], [0, 0, 1, 1], [], []>} : vector<2x64xbf16>, vector<64x128xbf16>, vector<2x128xf32> -> vector<2x128xf32>
    %114 = arith.addf %109, %113 : vector<2x128xf32>
    %115 = vector.extract_strided_slice %93 {offsets = [8, 0], sizes = [2, 64], strides = [1, 1]} : vector<32x64xbf16> to vector<2x64xbf16>
    %c4 = arith.constant 4 : index
    %c0_62 = arith.constant 0 : index
    %c0_63 = arith.constant 0 : index
    %116 = vector.load %arg6[%c4, %c0_62, %c0_63] : memref<16x64x128xbf16, #tpu.memory_space<vmem>>, vector<1x64x128xbf16>
    %117 = vector.shape_cast %116 : vector<1x64x128xbf16> to vector<64x128xbf16>
    %cst_64 = arith.constant dense<0.000000e+00> : vector<2x128xf32>
    %118 = tpu.matmul %115, %117, %cst_64 {dimension_numbers = #tpu.dot_dimension_numbers<[1], [0], [0], [1], [0, 0, 1, 1], [], []>} : vector<2x64xbf16>, vector<64x128xbf16>, vector<2x128xf32> -> vector<2x128xf32>
    %119 = arith.addf %114, %118 : vector<2x128xf32>
    %120 = vector.extract_strided_slice %93 {offsets = [10, 0], sizes = [2, 64], strides = [1, 1]} : vector<32x64xbf16> to vector<2x64xbf16>
    %c5 = arith.constant 5 : index
    %c0_65 = arith.constant 0 : index
    %c0_66 = arith.constant 0 : index
    %121 = vector.load %arg6[%c5, %c0_65, %c0_66] : memref<16x64x128xbf16, #tpu.memory_space<vmem>>, vector<1x64x128xbf16>
    %122 = vector.shape_cast %121 : vector<1x64x128xbf16> to vector<64x128xbf16>
    %cst_67 = arith.constant dense<0.000000e+00> : vector<2x128xf32>
    %123 = tpu.matmul %120, %122, %cst_67 {dimension_numbers = #tpu.dot_dimension_numbers<[1], [0], [0], [1], [0, 0, 1, 1], [], []>} : vector<2x64xbf16>, vector<64x128xbf16>, vector<2x128xf32> -> vector<2x128xf32>
    %124 = arith.addf %119, %123 : vector<2x128xf32>
    %125 = vector.extract_strided_slice %93 {offsets = [12, 0], sizes = [2, 64], strides = [1, 1]} : vector<32x64xbf16> to vector<2x64xbf16>
    %c6 = arith.constant 6 : index
    %c0_68 = arith.constant 0 : index
    %c0_69 = arith.constant 0 : index
    %126 = vector.load %arg6[%c6, %c0_68, %c0_69] : memref<16x64x128xbf16, #tpu.memory_space<vmem>>, vector<1x64x128xbf16>
    %127 = vector.shape_cast %126 : vector<1x64x128xbf16> to vector<64x128xbf16>
    %cst_70 = arith.constant dense<0.000000e+00> : vector<2x128xf32>
    %128 = tpu.matmul %125, %127, %cst_70 {dimension_numbers = #tpu.dot_dimension_numbers<[1], [0], [0], [1], [0, 0, 1, 1], [], []>} : vector<2x64xbf16>, vector<64x128xbf16>, vector<2x128xf32> -> vector<2x128xf32>
    %129 = arith.addf %124, %128 : vector<2x128xf32>
    %130 = vector.extract_strided_slice %93 {offsets = [14, 0], sizes = [2, 64], strides = [1, 1]} : vector<32x64xbf16> to vector<2x64xbf16>
    %c7 = arith.constant 7 : index
    %c0_71 = arith.constant 0 : index
    %c0_72 = arith.constant 0 : index
    %131 = vector.load %arg6[%c7, %c0_71, %c0_72] : memref<16x64x128xbf16, #tpu.memory_space<vmem>>, vector<1x64x128xbf16>
    %132 = vector.shape_cast %131 : vector<1x64x128xbf16> to vector<64x128xbf16>
    %cst_73 = arith.constant dense<0.000000e+00> : vector<2x128xf32>
    %133 = tpu.matmul %130, %132, %cst_73 {dimension_numbers = #tpu.dot_dimension_numbers<[1], [0], [0], [1], [0, 0, 1, 1], [], []>} : vector<2x64xbf16>, vector<64x128xbf16>, vector<2x128xf32> -> vector<2x128xf32>
    %134 = arith.addf %129, %133 : vector<2x128xf32>
    %135 = vector.extract_strided_slice %93 {offsets = [16, 0], sizes = [2, 64], strides = [1, 1]} : vector<32x64xbf16> to vector<2x64xbf16>
    %c8 = arith.constant 8 : index
    %c0_74 = arith.constant 0 : index
    %c0_75 = arith.constant 0 : index
    %136 = vector.load %arg6[%c8, %c0_74, %c0_75] : memref<16x64x128xbf16, #tpu.memory_space<vmem>>, vector<1x64x128xbf16>
    %137 = vector.shape_cast %136 : vector<1x64x128xbf16> to vector<64x128xbf16>
    %cst_76 = arith.constant dense<0.000000e+00> : vector<2x128xf32>
    %138 = tpu.matmul %135, %137, %cst_76 {dimension_numbers = #tpu.dot_dimension_numbers<[1], [0], [0], [1], [0, 0, 1, 1], [], []>} : vector<2x64xbf16>, vector<64x128xbf16>, vector<2x128xf32> -> vector<2x128xf32>
    %139 = arith.addf %134, %138 : vector<2x128xf32>
    %140 = vector.extract_strided_slice %93 {offsets = [18, 0], sizes = [2, 64], strides = [1, 1]} : vector<32x64xbf16> to vector<2x64xbf16>
    %c9 = arith.constant 9 : index
    %c0_77 = arith.constant 0 : index
    %c0_78 = arith.constant 0 : index
    %141 = vector.load %arg6[%c9, %c0_77, %c0_78] : memref<16x64x128xbf16, #tpu.memory_space<vmem>>, vector<1x64x128xbf16>
    %142 = vector.shape_cast %141 : vector<1x64x128xbf16> to vector<64x128xbf16>
    %cst_79 = arith.constant dense<0.000000e+00> : vector<2x128xf32>
    %143 = tpu.matmul %140, %142, %cst_79 {dimension_numbers = #tpu.dot_dimension_numbers<[1], [0], [0], [1], [0, 0, 1, 1], [], []>} : vector<2x64xbf16>, vector<64x128xbf16>, vector<2x128xf32> -> vector<2x128xf32>
    %144 = arith.addf %139, %143 : vector<2x128xf32>
    %145 = vector.extract_strided_slice %93 {offsets = [20, 0], sizes = [2, 64], strides = [1, 1]} : vector<32x64xbf16> to vector<2x64xbf16>
    %c10 = arith.constant 10 : index
    %c0_80 = arith.constant 0 : index
    %c0_81 = arith.constant 0 : index
    %146 = vector.load %arg6[%c10, %c0_80, %c0_81] : memref<16x64x128xbf16, #tpu.memory_space<vmem>>, vector<1x64x128xbf16>
    %147 = vector.shape_cast %146 : vector<1x64x128xbf16> to vector<64x128xbf16>
    %cst_82 = arith.constant dense<0.000000e+00> : vector<2x128xf32>
    %148 = tpu.matmul %145, %147, %cst_82 {dimension_numbers = #tpu.dot_dimension_numbers<[1], [0], [0], [1], [0, 0, 1, 1], [], []>} : vector<2x64xbf16>, vector<64x128xbf16>, vector<2x128xf32> -> vector<2x128xf32>
    %149 = arith.addf %144, %148 : vector<2x128xf32>
    %150 = vector.extract_strided_slice %93 {offsets = [22, 0], sizes = [2, 64], strides = [1, 1]} : vector<32x64xbf16> to vector<2x64xbf16>
    %c11 = arith.constant 11 : index
    %c0_83 = arith.constant 0 : index
    %c0_84 = arith.constant 0 : index
    %151 = vector.load %arg6[%c11, %c0_83, %c0_84] : memref<16x64x128xbf16, #tpu.memory_space<vmem>>, vector<1x64x128xbf16>
    %152 = vector.shape_cast %151 : vector<1x64x128xbf16> to vector<64x128xbf16>
    %cst_85 = arith.constant dense<0.000000e+00> : vector<2x128xf32>
    %153 = tpu.matmul %150, %152, %cst_85 {dimension_numbers = #tpu.dot_dimension_numbers<[1], [0], [0], [1], [0, 0, 1, 1], [], []>} : vector<2x64xbf16>, vector<64x128xbf16>, vector<2x128xf32> -> vector<2x128xf32>
    %154 = arith.addf %149, %153 : vector<2x128xf32>
    %155 = vector.extract_strided_slice %93 {offsets = [24, 0], sizes = [2, 64], strides = [1, 1]} : vector<32x64xbf16> to vector<2x64xbf16>
    %c12 = arith.constant 12 : index
    %c0_86 = arith.constant 0 : index
    %c0_87 = arith.constant 0 : index
    %156 = vector.load %arg6[%c12, %c0_86, %c0_87] : memref<16x64x128xbf16, #tpu.memory_space<vmem>>, vector<1x64x128xbf16>
    %157 = vector.shape_cast %156 : vector<1x64x128xbf16> to vector<64x128xbf16>
    %cst_88 = arith.constant dense<0.000000e+00> : vector<2x128xf32>
    %158 = tpu.matmul %155, %157, %cst_88 {dimension_numbers = #tpu.dot_dimension_numbers<[1], [0], [0], [1], [0, 0, 1, 1], [], []>} : vector<2x64xbf16>, vector<64x128xbf16>, vector<2x128xf32> -> vector<2x128xf32>
    %159 = arith.addf %154, %158 : vector<2x128xf32>
    %160 = vector.extract_strided_slice %93 {offsets = [26, 0], sizes = [2, 64], strides = [1, 1]} : vector<32x64xbf16> to vector<2x64xbf16>
    %c13 = arith.constant 13 : index
    %c0_89 = arith.constant 0 : index
    %c0_90 = arith.constant 0 : index
    %161 = vector.load %arg6[%c13, %c0_89, %c0_90] : memref<16x64x128xbf16, #tpu.memory_space<vmem>>, vector<1x64x128xbf16>
    %162 = vector.shape_cast %161 : vector<1x64x128xbf16> to vector<64x128xbf16>
    %cst_91 = arith.constant dense<0.000000e+00> : vector<2x128xf32>
    %163 = tpu.matmul %160, %162, %cst_91 {dimension_numbers = #tpu.dot_dimension_numbers<[1], [0], [0], [1], [0, 0, 1, 1], [], []>} : vector<2x64xbf16>, vector<64x128xbf16>, vector<2x128xf32> -> vector<2x128xf32>
    %164 = arith.addf %159, %163 : vector<2x128xf32>
    %165 = vector.extract_strided_slice %93 {offsets = [28, 0], sizes = [2, 64], strides = [1, 1]} : vector<32x64xbf16> to vector<2x64xbf16>
    %c14 = arith.constant 14 : index
    %c0_92 = arith.constant 0 : index
    %c0_93 = arith.constant 0 : index
    %166 = vector.load %arg6[%c14, %c0_92, %c0_93] : memref<16x64x128xbf16, #tpu.memory_space<vmem>>, vector<1x64x128xbf16>
    %167 = vector.shape_cast %166 : vector<1x64x128xbf16> to vector<64x128xbf16>
    %cst_94 = arith.constant dense<0.000000e+00> : vector<2x128xf32>
    %168 = tpu.matmul %165, %167, %cst_94 {dimension_numbers = #tpu.dot_dimension_numbers<[1], [0], [0], [1], [0, 0, 1, 1], [], []>} : vector<2x64xbf16>, vector<64x128xbf16>, vector<2x128xf32> -> vector<2x128xf32>
    %169 = arith.addf %164, %168 : vector<2x128xf32>
    %170 = vector.extract_strided_slice %93 {offsets = [30, 0], sizes = [2, 64], strides = [1, 1]} : vector<32x64xbf16> to vector<2x64xbf16>
    %c15 = arith.constant 15 : index
    %c0_95 = arith.constant 0 : index
    %c0_96 = arith.constant 0 : index
    %171 = vector.load %arg6[%c15, %c0_95, %c0_96] : memref<16x64x128xbf16, #tpu.memory_space<vmem>>, vector<1x64x128xbf16>
    %172 = vector.shape_cast %171 : vector<1x64x128xbf16> to vector<64x128xbf16>
    %cst_97 = arith.constant dense<0.000000e+00> : vector<2x128xf32>
    %173 = tpu.matmul %170, %172, %cst_97 {dimension_numbers = #tpu.dot_dimension_numbers<[1], [0], [0], [1], [0, 0, 1, 1], [], []>} : vector<2x64xbf16>, vector<64x128xbf16>, vector<2x128xf32> -> vector<2x128xf32>
    %174 = arith.addf %169, %173 : vector<2x128xf32>
    %175 = vector.broadcast %3 : vector<1x128xf32> to vector<2x128xf32>
    %176 = arith.addf %174, %175 : vector<2x128xf32>
    %cst_98 = arith.constant 0.000000e+00 : f32
    %177 = vector.broadcast %cst_98 : f32 to vector<2x128xf32>
    %178 = arith.maximumf %176, %177 : vector<2x128xf32>
    %179 = arith.truncf %178 : vector<2x128xf32> to vector<2x128xbf16>
    %c0_99 = arith.constant 0 : index
    %c0_100 = arith.constant 0 : index
    %180 = vector.load %arg7[%c0_99, %c0_100] : memref<128x128xbf16, #tpu.memory_space<vmem>>, vector<128x128xbf16>
    %cst_101 = arith.constant dense<0.000000e+00> : vector<2x128xf32>
    %181 = tpu.matmul %179, %180, %cst_101 {dimension_numbers = #tpu.dot_dimension_numbers<[1], [0], [0], [1], [0, 0, 1, 1], [], []>} : vector<2x128xbf16>, vector<128x128xbf16>, vector<2x128xf32> -> vector<2x128xf32>
    %182 = vector.broadcast %4 : vector<1x128xf32> to vector<2x128xf32>
    %183 = arith.addf %181, %182 : vector<2x128xf32>
    %c0_102 = arith.constant 0 : index
    %c0_103 = arith.constant 0 : index
    %184 = vector.load %arg8[%c0_102, %c0_103] : memref<2x128xf32, #tpu.memory_space<vmem>>, vector<2x128xf32>
    tpu.vector_store %arg8[%c0_102, %c0_103], %183 {strides = array<i32>} : memref<2x128xf32, #tpu.memory_space<vmem>>, vector<2x128xf32>,
    return
  }
  func.func @transform_0(%arg0: i32) -> (i32, i32, i32) {
    %c0_i32 = arith.constant 0 : i32
    %c0_i32_0 = arith.constant 0 : i32
    %c0_i32_1 = arith.constant 0 : i32
    return %c0_i32, %arg0, %c0_i32_0 : i32, i32, i32
  }
  func.func @transform_1(%arg0: i32) -> (i32, i32) {
    %c0_i32 = arith.constant 0 : i32
    %c0_i32_0 = arith.constant 0 : i32
    %c0_i32_1 = arith.constant 0 : i32
    return %c0_i32, %c0_i32_0 : i32, i32
  }
  func.func @transform_2(%arg0: i32) -> (i32, i32, i32) {
    %c0_i32 = arith.constant 0 : i32
    %c0_i32_0 = arith.constant 0 : i32
    %c0_i32_1 = arith.constant 0 : i32
    %c0_i32_2 = arith.constant 0 : i32
    return %c0_i32, %c0_i32_0, %c0_i32_1 : i32, i32, i32
  }
  func.func @transform_3(%arg0: i32) -> (i32, i32, i32) {
    %c0_i32 = arith.constant 0 : i32
    %c0_i32_0 = arith.constant 0 : i32
    %c0_i32_1 = arith.constant 0 : i32
    %c0_i32_2 = arith.constant 0 : i32
    return %c0_i32, %c0_i32_0, %c0_i32_1 : i32, i32, i32
  }
  func.func @transform_4(%arg0: i32) -> (i32, i32) {
    %c0_i32 = arith.constant 0 : i32
    %c0_i32_0 = arith.constant 0 : i32
    %c0_i32_1 = arith.constant 0 : i32
    return %c0_i32, %c0_i32_0 : i32, i32
  }
  func.func @transform_5(%arg0: i32) -> (i32, i32, i32) {
    %c0_i32 = arith.constant 0 : i32
    %c0_i32_0 = arith.constant 0 : i32
    %c0_i32_1 = arith.constant 0 : i32
    %c0_i32_2 = arith.constant 0 : i32
    return %c0_i32, %c0_i32_0, %c0_i32_1 : i32, i32, i32
  }
  func.func @transform_6(%arg0: i32) -> (i32, i32) {
    %c0_i32 = arith.constant 0 : i32
    %c0_i32_0 = arith.constant 0 : i32
    %c0_i32_1 = arith.constant 0 : i32
    return %c0_i32, %c0_i32_0 : i32, i32
  }
  func.func @transform_7(%arg0: i32) -> (i32, i32) {
    %c0_i32 = arith.constant 0 : i32
    %c0_i32_0 = arith.constant 0 : i32
    return %arg0, %c0_i32 : i32, i32
  }
}

</mosaic_0001>

<llo_original>
// kernel: tpu_custom_call.1
$region0: #{tpu_custom_call.1}
  #allocation0 [shape = 'u32[]', space=smem, size = 0x4, offset = 0x4, fixed_abs, tag = 'smem constant byte address 0x4 - core index']
  #allocation1 [shape = 'u32[144,128]{1,0:T(1,128)}', space=vmem, size = 0x12000, scoped, tag = 'internal scratch']
  %s0 = inlined_call_operand.vmem [shape: f32[16,2,1], index: 0, kind: input, shape index: {}]
  %s1 = inlined_call_operand.vmem [shape: f32[3,16], index: 1, kind: input, shape index: {}]
  %s2 = inlined_call_operand.vmem [shape: bf16[3,16,32], index: 2, kind: input, shape index: {}]
  %s3 = inlined_call_operand.hbm [shape: bf16[3,32,64], index: 3, kind: input, shape index: {}]
  %s4 = inlined_call_operand.vmem [shape: f32[1,640], index: 4, kind: input, shape index: {}]
  %s5 = inlined_call_operand.hbm [shape: bf16[16,64,128], index: 5, kind: input, shape index: {}]
  %s6 = inlined_call_operand.hbm [shape: bf16[128,128], index: 6, kind: input, shape index: {}]
  %s7 = inlined_call_operand.hbm [shape: f32[2,128], index: 7, kind: output, shape index: {}]
  %s8 = sld [smem:[#allocation0]]
  $region50: #{tpu_custom_call.1} parent=0
    _
  %s10 = ssub.s32 1, %s8
  %s11 = scalar_select 0, %s10, %s8
  $region1: #{tpu_custom_call.1} parent=0
    #allocation2 [shape = 'u8[24576]{0}', space=vmem, size = 0x6000, scoped, tag = 'input window, operand 3, single buffered']
    #allocation3 [shape = 's32[1]{0}', space=sflag, size = 0x4, scoped, tag = 'scoped memory for tpu_custom_call.1']
    #allocation4 [shape = 's32[1]{0}', space=sflag, size = 0x4, scoped, tag = 'scoped memory for tpu_custom_call.1']
    #allocation5 [shape = 'u8[262144]{0}', space=vmem, size = 0x40000, scoped, tag = 'input window, operand 5, single buffered']
    #allocation6 [shape = 's32[1]{0}', space=sflag, size = 0x4, scoped, tag = 'scoped memory for tpu_custom_call.1']
    #allocation7 [shape = 'u8[32768]{0}', space=vmem, size = 0x8000, scoped, tag = 'input window, operand 6, single buffered']
    #allocation8 [shape = 'u8[1024]{0}', space=vmem, size = 0x400, scoped, tag = 'output window, operand 0, single buffered']
    %12 = vsyncpa [#allocation3], 0
    %13 = vsyncpa [#allocation6], 0
    %14 = vsyncpa [#allocation4], 0
    // Predicated region
    $region2: #{tpu_custom_call.1} parent=1 // pred_check
      _
    $region3: #{tpu_custom_call.1} parent=1 // pred_check_branch
      %16 = sbr.rel (0) target = $region5
    $region4: #{tpu_custom_call.1} parent=1 // pred_region
      _
    $region5: #{tpu_custom_call.1} parent=1 // pred_fallthru
      _
    // Predicated region
    $region6: #{tpu_custom_call.1} parent=1 // pred_check
      _
    $region7: #{tpu_custom_call.1} parent=1 // pred_check_branch
      %18 = sbr.rel (0) target = $region9
    $region8: #{tpu_custom_call.1} parent=1 // pred_region
      _
    $region9: #{tpu_custom_call.1} parent=1 // pred_fallthru
      _
    // Predicated region
    $region10: #{tpu_custom_call.1} parent=1 // pred_check
      _
    $region11: #{tpu_custom_call.1} parent=1 // pred_check_branch
      %20 = sbr.rel (0) target = $region13
    $region12: #{tpu_custom_call.1} parent=1 // pred_region
      _
    $region13: #{tpu_custom_call.1} parent=1 // pred_fallthru
      _
    // Predicated region
    $region14: #{tpu_custom_call.1} parent=1 // pred_check
      _
    $region15: #{tpu_custom_call.1} parent=1 // pred_check_branch
      %22 = sbr.rel (0) target = $region17
    $region16: #{tpu_custom_call.1} parent=1 // pred_region
      %s24 = ssub.s32 768, 768
      %25 = vsyncadd [#allocation3], %s24
      %s26 = sshll.u32 [#allocation2], 4
      %s27 = int_to_ptr.vmem [resolvable:$true] %s26
      %32 = dma.hbm_to_vmem [thread:$0]  %s3, 768, %s27, [#allocation3], 64, 64, 4
    $region17: #{tpu_custom_call.1} parent=1 // pred_fallthru
      _
    // Predicated region
    $region18: #{tpu_custom_call.1} parent=1 // pred_check
      _
    $region19: #{tpu_custom_call.1} parent=1 // pred_check_branch
      %34 = sbr.rel (0) target = $region21
    $region20: #{tpu_custom_call.1} parent=1 // pred_region
      _
    $region21: #{tpu_custom_call.1} parent=1 // pred_fallthru
      _
    // Predicated region
    $region22: #{tpu_custom_call.1} parent=1 // pred_check
      _
    $region23: #{tpu_custom_call.1} parent=1 // pred_check_branch
      %36 = sbr.rel (0) target = $region25
    $region24: #{tpu_custom_call.1} parent=1 // pred_region
      %s38 = ssub.s32 8192, 8192
      %39 = vsyncadd [#allocation6], %s38
      %s40 = sshll.u32 [#allocation5], 4
      %s41 = int_to_ptr.vmem [resolvable:$true] %s40
      %46 = dma.hbm_to_vmem [thread:$0]  %s5, 8192, %s41, [#allocation6], 64, 64, 4
    $region25: #{tpu_custom_call.1} parent=1 // pred_fallthru
      _
    // Predicated region
    $region26: #{tpu_custom_call.1} parent=1 // pred_check
      _
    $region27: #{tpu_custom_call.1} parent=1 // pred_check_branch
      %48 = sbr.rel (0) target = $region29
    $region28: #{tpu_custom_call.1} parent=1 // pred_region
      %s50 = ssub.s32 1024, 1024
      %51 = vsyncadd [#allocation6], %s50
      %s52 = sshll.u32 [#allocation7], 4
      %s53 = int_to_ptr.vmem [resolvable:$true] %s52
      %58 = dma.hbm_to_vmem [thread:$0]  %s6, 1024, %s53, [#allocation6], 64, 64, 4
    $region29: #{tpu_custom_call.1} parent=1 // pred_fallthru
      _
    // Predicated region
    $region30: #{tpu_custom_call.1} parent=1 // pred_check
      _
    $region31: #{tpu_custom_call.1} parent=1 // pred_check_branch
      %60 = sbr.rel (0) target = $region33
    $region32: #{tpu_custom_call.1} parent=1 // pred_region
      %61 = dma.done [#allocation3], 768
    $region33: #{tpu_custom_call.1} parent=1 // pred_fallthru
      _
    // Predicated region
    $region34: #{tpu_custom_call.1} parent=1 // pred_check
      _
    $region35: #{tpu_custom_call.1} parent=1 // pred_check_branch
      %63 = sbr.rel (0) target = $region37
    $region36: #{tpu_custom_call.1} parent=1 // pred_region
      %64 = dma.done [#allocation6], 8192
    $region37: #{tpu_custom_call.1} parent=1 // pred_fallthru
      _
    // Predicated region
    $region38: #{tpu_custom_call.1} parent=1 // pred_check
      _
    $region39: #{tpu_custom_call.1} parent=1 // pred_check_branch
      %66 = sbr.rel (0) target = $region41
    $region40: #{tpu_custom_call.1} parent=1 // pred_region
      %67 = dma.done [#allocation6], 1024
    $region41: #{tpu_custom_call.1} parent=1 // pred_fallthru
      _
    %v69 = vld [vmem:[%s4] sm:$0x1]
    %v70 = vld [vmem:[%s4 + $0x1] sm:$0x1]
    %v71 = vld [vmem:[%s4 + $0x2] sm:$0x1]
    %v72 = vld [vmem:[%s4 + $0x3] sm:$0x1]
    %v73 = vld [vmem:[%s4 + $0x4] sm:$0x1]
    %v74 = vlaneseq
    %v75 = vshrl.u32 %v74, 7
    %v76 = vadd.s32 %v75, 8
    %v77 = vadd.s32 %v75, 16
    %v78 = vadd.s32 %v75, 24
    %vm79 = vcmp.lt.s32.totalorder %v75, 2
    %vm80 = vcmp.lt.s32.totalorder %v76, 2
    %vm81 = vcmp.lt.s32.totalorder %v77, 2
    %vm82 = vcmp.lt.s32.totalorder %v78, 2
    %vm83 = vcmp.ge.s32.totalorder %v75, 30
    %vm84 = vcmp.ge.s32.totalorder %v76, 30
    %vm85 = vcmp.ge.s32.totalorder %v77, 30
    %vm86 = vcmp.ge.s32.totalorder %v78, 30
    %v87 = vld [vmem:[%s0] sm:$0x3]
    %v88 = vld [vmem:[%s0 + $0x2] sm:$0x3]
    %v89 = vld [vmem:[%s0 + $0x4] sm:$0x3]
    %v90 = vld [vmem:[%s0 + $0x6] sm:$0x3]
    %v91 = vld [vmem:[%s0 + $0x8] sm:$0x3]
    %v92 = vld [vmem:[%s0 + $0xa] sm:$0x3]
    %v93 = vld [vmem:[%s0 + $0xc] sm:$0x3]
    %v94 = vld [vmem:[%s0 + $0xe] sm:$0x3]
    %v95 = vld [vmem:[%s0 + $0x10] sm:$0x3]
    %v96 = vld [vmem:[%s0 + $0x12] sm:$0x3]
    %v97 = vld [vmem:[%s0 + $0x14] sm:$0x3]
    %v98 = vld [vmem:[%s0 + $0x16] sm:$0x3]
    %v99 = vld [vmem:[%s0 + $0x18] sm:$0x3]
    %v100 = vld [vmem:[%s0 + $0x1a] sm:$0x3]
    %v101 = vld [vmem:[%s0 + $0x1c] sm:$0x3]
    %v102 = vld [vmem:[%s0 + $0x1e] sm:$0x3]
    %v103 = vld [vmem:[%s1] sm:$0x7]
    %v120 = vcombine.low %v87, %v88
    %v121 = vcombine.low %v89, %v90
    %v123 = vunpack.c.l.s4 1983009808
    %v124 = vunpack.c.0.s8 %v123
    %v125 = vlaneseq
    %v126 = vshrl.u32 %v125, 7
    %v127 = vsub.s32 %v124, %v126
    %v128 = vrot.slane %v120, %v127
    %v130 = vunpack.c.l.s4 1983009808
    %v131 = vunpack.c.0.s8 %v130
    %v132 = vlaneseq
    %v133 = vshrl.u32 %v132, 7
    %v134 = vsub.s32 %v131, %v133
    %v135 = vrot.slane %v121, %v134
    %v136 = vcombine.low %v128, %v135
    %v137 = vcombine.low %v91, %v92
    %v138 = vcombine.low %v93, %v94
    %v140 = vunpack.c.l.s4 1983009808
    %v141 = vunpack.c.0.s8 %v140
    %v142 = vlaneseq
    %v143 = vshrl.u32 %v142, 7
    %v144 = vsub.s32 %v141, %v143
    %v145 = vrot.slane %v137, %v144
    %v147 = vunpack.c.l.s4 1983009808
    %v148 = vunpack.c.0.s8 %v147
    %v149 = vlaneseq
    %v150 = vshrl.u32 %v149, 7
    %v151 = vsub.s32 %v148, %v150
    %v152 = vrot.slane %v138, %v151
    %v153 = vcombine.low %v145, %v152
    %v154 = vcombine.low %v95, %v96
    %v155 = vcombine.low %v97, %v98
    %v157 = vunpack.c.l.s4 1983009808
    %v158 = vunpack.c.0.s8 %v157
    %v159 = vlaneseq
    %v160 = vshrl.u32 %v159, 7
    %v161 = vsub.s32 %v158, %v160
    %v162 = vrot.slane %v154, %v161
    %v164 = vunpack.c.l.s4 1983009808
    %v165 = vunpack.c.0.s8 %v164
    %v166 = vlaneseq
    %v167 = vshrl.u32 %v166, 7
    %v168 = vsub.s32 %v165, %v167
    %v169 = vrot.slane %v155, %v168
    %v170 = vcombine.low %v162, %v169
    %v171 = vcombine.low %v99, %v100
    %v172 = vcombine.low %v101, %v102
    %v174 = vunpack.c.l.s4 1983009808
    %v175 = vunpack.c.0.s8 %v174
    %v176 = vlaneseq
    %v177 = vshrl.u32 %v176, 7
    %v178 = vsub.s32 %v175, %v177
    %v179 = vrot.slane %v171, %v178
    %v181 = vunpack.c.l.s4 1983009808
    %v182 = vunpack.c.0.s8 %v181
    %v183 = vlaneseq
    %v184 = vshrl.u32 %v183, 7
    %v185 = vsub.s32 %v182, %v184
    %v186 = vrot.slane %v172, %v185
    %v187 = vcombine.low %v179, %v186
    %v192 = vrot.slane %v136, 6
    %v193 = vrot.slane %v153, 6
    %v194 = vrot.slane %v170, 6
    %v195 = vrot.slane %v187, 6
    %v196 = vsel %vm79, %v194, %v195
    %v197 = vsel %vm79, %v193, %v194
    %v198 = vsel %vm79, %v192, %v193
    %v199 = vsel %vm79, %v195, %v192
    %v200 = vsel %vm79, 0.0, %v199
    %v201 = vsel %vm80, 0.0, %v198
    %v202 = vsel %vm81, 0.0, %v197
    %v203 = vsel %vm82, 0.0, %v196
    %205 = vset.pattern.permute.xlu0 0
    %206 = vperm.xlu0 %205, %v200
    %v207 = vpop.permute.xlu0 %206
    %210 = vset.pattern.permute.xlu0 0
    %211 = vperm.xlu0 %210, %v201
    %v212 = vpop.permute.xlu0 %211
    %215 = vset.pattern.permute.xlu0 0
    %216 = vperm.xlu0 %215, %v202
    %v217 = vpop.permute.xlu0 %216
    %220 = vset.pattern.permute.xlu0 0
    %221 = vperm.xlu0 %220, %v203
    %v222 = vpop.permute.xlu0 %221
    %v224 = vlaneseq
    %v225 = vshrl.u32 %v224, 7
    %v226 = vsub.s32 0, %v225
    %v227 = vrot.slane %v103, %v226
    %v228 = vmul.f32 %v207, %v227
    %v229 = vmul.f32 %v212, %v227
    %v230 = vmul.f32 %v217, %v227
    %v231 = vmul.f32 %v222, %v227
    %232 = vset.pattern.permute.xlu0 0
    %233 = vperm.xlu0 %232, %v87
    %v234 = vpop.permute.xlu0 %233
    %v237 = vunpack.c.l.s4 269488144
    %v238 = vunpack.c.0.s8 %v237
    %v239 = vlaneseq
    %v240 = vshrl.u32 %v239, 7
    %v241 = vsub.s32 %v238, %v240
    %v242 = vrot.slane %v234, %v241
    %243 = vset.pattern.permute.xlu0 0
    %244 = vperm.xlu0 %243, %v88
    %v245 = vpop.permute.xlu0 %244
    %v248 = vunpack.c.l.s4 269488144
    %v249 = vunpack.c.0.s8 %v248
    %v250 = vlaneseq
    %v251 = vshrl.u32 %v250, 7
    %v252 = vsub.s32 %v249, %v251
    %v253 = vrot.slane %v245, %v252
    %254 = vset.pattern.permute.xlu0 0
    %255 = vperm.xlu0 %254, %v89
    %v256 = vpop.permute.xlu0 %255
    %v259 = vunpack.c.l.s4 269488144
    %v260 = vunpack.c.0.s8 %v259
    %v261 = vlaneseq
    %v262 = vshrl.u32 %v261, 7
    %v263 = vsub.s32 %v260, %v262
    %v264 = vrot.slane %v256, %v263
    %265 = vset.pattern.permute.xlu0 0
    %266 = vperm.xlu0 %265, %v90
    %v267 = vpop.permute.xlu0 %266
    %v270 = vunpack.c.l.s4 269488144
    %v271 = vunpack.c.0.s8 %v270
    %v272 = vlaneseq
    %v273 = vshrl.u32 %v272, 7
    %v274 = vsub.s32 %v271, %v273
    %v275 = vrot.slane %v267, %v274
    %276 = vset.pattern.permute.xlu0 0
    %277 = vperm.xlu0 %276, %v91
    %v278 = vpop.permute.xlu0 %277
    %v281 = vunpack.c.l.s4 269488144
    %v282 = vunpack.c.0.s8 %v281
    %v283 = vlaneseq
    %v284 = vshrl.u32 %v283, 7
    %v285 = vsub.s32 %v282, %v284
    %v286 = vrot.slane %v278, %v285
    %287 = vset.pattern.permute.xlu0 0
    %288 = vperm.xlu0 %287, %v92
    %v289 = vpop.permute.xlu0 %288
    %v292 = vunpack.c.l.s4 269488144
    %v293 = vunpack.c.0.s8 %v292
    %v294 = vlaneseq
    %v295 = vshrl.u32 %v294, 7
    %v296 = vsub.s32 %v293, %v295
    %v297 = vrot.slane %v289, %v296
    %298 = vset.pattern.permute.xlu0 0
    %299 = vperm.xlu0 %298, %v93
    %v300 = vpop.permute.xlu0 %299
    %v303 = vunpack.c.l.s4 269488144
    %v304 = vunpack.c.0.s8 %v303
    %v305 = vlaneseq
    %v306 = vshrl.u32 %v305, 7
    %v307 = vsub.s32 %v304, %v306
    %v308 = vrot.slane %v300, %v307
    %309 = vset.pattern.permute.xlu0 0
    %310 = vperm.xlu0 %309, %v94
    %v311 = vpop.permute.xlu0 %310
    %v314 = vunpack.c.l.s4 269488144
    %v315 = vunpack.c.0.s8 %v314
    %v316 = vlaneseq
    %v317 = vshrl.u32 %v316, 7
    %v318 = vsub.s32 %v315, %v317
    %v319 = vrot.slane %v311, %v318
    %320 = vset.pattern.permute.xlu0 0
    %321 = vperm.xlu0 %320, %v95
    %v322 = vpop.permute.xlu0 %321
    %v325 = vunpack.c.l.s4 269488144
    %v326 = vunpack.c.0.s8 %v325
    %v327 = vlaneseq
    %v328 = vshrl.u32 %v327, 7
    %v329 = vsub.s32 %v326, %v328
    %v330 = vrot.slane %v322, %v329
    %331 = vset.pattern.permute.xlu0 0
    %332 = vperm.xlu0 %331, %v96
    %v333 = vpop.permute.xlu0 %332
    %v336 = vunpack.c.l.s4 269488144
    %v337 = vunpack.c.0.s8 %v336
    %v338 = vlaneseq
    %v339 = vshrl.u32 %v338, 7
    %v340 = vsub.s32 %v337, %v339
    %v341 = vrot.slane %v333, %v340
    %342 = vset.pattern.permute.xlu0 0
    %343 = vperm.xlu0 %342, %v97
    %v344 = vpop.permute.xlu0 %343
    %v347 = vunpack.c.l.s4 269488144
    %v348 = vunpack.c.0.s8 %v347
    %v349 = vlaneseq
    %v350 = vshrl.u32 %v349, 7
    %v351 = vsub.s32 %v348, %v350
    %v352 = vrot.slane %v344, %v351
    %353 = vset.pattern.permute.xlu0 0
    %354 = vperm.xlu0 %353, %v98
    %v355 = vpop.permute.xlu0 %354
    %v358 = vunpack.c.l.s4 269488144
    %v359 = vunpack.c.0.s8 %v358
    %v360 = vlaneseq
    %v361 = vshrl.u32 %v360, 7
    %v362 = vsub.s32 %v359, %v361
    %v363 = vrot.slane %v355, %v362
    %364 = vset.pattern.permute.xlu0 0
    %365 = vperm.xlu0 %364, %v99
    %v366 = vpop.permute.xlu0 %365
    %v369 = vunpack.c.l.s4 269488144
    %v370 = vunpack.c.0.s8 %v369
    %v371 = vlaneseq
    %v372 = vshrl.u32 %v371, 7
    %v373 = vsub.s32 %v370, %v372
    %v374 = vrot.slane %v366, %v373
    %375 = vset.pattern.permute.xlu0 0
    %376 = vperm.xlu0 %375, %v100
    %v377 = vpop.permute.xlu0 %376
    %v380 = vunpack.c.l.s4 269488144
    %v381 = vunpack.c.0.s8 %v380
    %v382 = vlaneseq
    %v383 = vshrl.u32 %v382, 7
    %v384 = vsub.s32 %v381, %v383
    %v385 = vrot.slane %v377, %v384
    %386 = vset.pattern.permute.xlu0 0
    %387 = vperm.xlu0 %386, %v101
    %v388 = vpop.permute.xlu0 %387
    %v391 = vunpack.c.l.s4 269488144
    %v392 = vunpack.c.0.s8 %v391
    %v393 = vlaneseq
    %v394 = vshrl.u32 %v393, 7
    %v395 = vsub.s32 %v392, %v394
    %v396 = vrot.slane %v388, %v395
    %397 = vset.pattern.permute.xlu0 0
    %398 = vperm.xlu0 %397, %v102
    %v399 = vpop.permute.xlu0 %398
    %v402 = vunpack.c.l.s4 269488144
    %v403 = vunpack.c.0.s8 %v402
    %v404 = vlaneseq
    %v405 = vshrl.u32 %v404, 7
    %v406 = vsub.s32 %v403, %v405
    %v407 = vrot.slane %v399, %v406
    %v408 = vlaneseq
    %v409 = vshrl.u32 %v408, 7
    %v410 = vsub.s32 1, %v409
    %v411 = vrot.slane %v103, %v410
    %v413 = vcombine.high %v411, %v411
    %v415 = vunpack.c.l.s4 1983009808
    %v416 = vunpack.c.0.s8 %v415
    %v417 = vlaneseq
    %v418 = vshrl.u32 %v417, 7
    %v419 = vsub.s32 %v416, %v418
    %v420 = vrot.slane %v411, %v419
    %v422 = vunpack.c.l.s4 1983009808
    %v423 = vunpack.c.0.s8 %v422
    %v424 = vlaneseq
    %v425 = vshrl.u32 %v424, 7
    %v426 = vsub.s32 %v423, %v425
    %v427 = vrot.slane %v413, %v426
    %v428 = vcombine.high %v420, %v420
    %v429 = vcombine.high %v427, %v427
    %v434 = vmul.f32 %v242, %v420
    %v435 = vmul.f32 %v253, %v428
    %v436 = vmul.f32 %v264, %v427
    %v437 = vmul.f32 %v275, %v429
    %v438 = vmul.f32 %v286, %v420
    %v439 = vmul.f32 %v297, %v428
    %v440 = vmul.f32 %v308, %v427
    %v441 = vmul.f32 %v319, %v429
    %v442 = vmul.f32 %v330, %v420
    %v443 = vmul.f32 %v341, %v428
    %v444 = vmul.f32 %v352, %v427
    %v445 = vmul.f32 %v363, %v429
    %v446 = vmul.f32 %v374, %v420
    %v447 = vmul.f32 %v385, %v428
    %v448 = vmul.f32 %v396, %v427
    %v449 = vmul.f32 %v407, %v429
    %v466 = vcombine.low %v434, %v435
    %v467 = vcombine.low %v436, %v437
    %v469 = vunpack.c.l.s4 1983009808
    %v470 = vunpack.c.0.s8 %v469
    %v471 = vlaneseq
    %v472 = vshrl.u32 %v471, 7
    %v473 = vsub.s32 %v470, %v472
    %v474 = vrot.slane %v466, %v473
    %v476 = vunpack.c.l.s4 1983009808
    %v477 = vunpack.c.0.s8 %v476
    %v478 = vlaneseq
    %v479 = vshrl.u32 %v478, 7
    %v480 = vsub.s32 %v477, %v479
    %v481 = vrot.slane %v467, %v480
    %v482 = vcombine.low %v474, %v481
    %v483 = vcombine.low %v438, %v439
    %v484 = vcombine.low %v440, %v441
    %v486 = vunpack.c.l.s4 1983009808
    %v487 = vunpack.c.0.s8 %v486
    %v488 = vlaneseq
    %v489 = vshrl.u32 %v488, 7
    %v490 = vsub.s32 %v487, %v489
    %v491 = vrot.slane %v483, %v490
    %v493 = vunpack.c.l.s4 1983009808
    %v494 = vunpack.c.0.s8 %v493
    %v495 = vlaneseq
    %v496 = vshrl.u32 %v495, 7
    %v497 = vsub.s32 %v494, %v496
    %v498 = vrot.slane %v484, %v497
    %v499 = vcombine.low %v491, %v498
    %v500 = vcombine.low %v442, %v443
    %v501 = vcombine.low %v444, %v445
    %v503 = vunpack.c.l.s4 1983009808
    %v504 = vunpack.c.0.s8 %v503
    %v505 = vlaneseq
    %v506 = vshrl.u32 %v505, 7
    %v507 = vsub.s32 %v504, %v506
    %v508 = vrot.slane %v500, %v507
    %v510 = vunpack.c.l.s4 1983009808
    %v511 = vunpack.c.0.s8 %v510
    %v512 = vlaneseq
    %v513 = vshrl.u32 %v512, 7
    %v514 = vsub.s32 %v511, %v513
    %v515 = vrot.slane %v501, %v514
    %v516 = vcombine.low %v508, %v515
    %v517 = vcombine.low %v446, %v447
    %v518 = vcombine.low %v448, %v449
    %v520 = vunpack.c.l.s4 1983009808
    %v521 = vunpack.c.0.s8 %v520
    %v522 = vlaneseq
    %v523 = vshrl.u32 %v522, 7
    %v524 = vsub.s32 %v521, %v523
    %v525 = vrot.slane %v517, %v524
    %v527 = vunpack.c.l.s4 1983009808
    %v528 = vunpack.c.0.s8 %v527
    %v529 = vlaneseq
    %v530 = vshrl.u32 %v529, 7
    %v531 = vsub.s32 %v528, %v530
    %v532 = vrot.slane %v518, %v531
    %v533 = vcombine.low %v525, %v532
    %v538 = vadd.f32 %v228, %v482
    %v539 = vadd.f32 %v229, %v499
    %v540 = vadd.f32 %v230, %v516
    %v541 = vadd.f32 %v231, %v533
    %v542 = vrot.slane %v136, 2
    %v543 = vrot.slane %v153, 2
    %v544 = vrot.slane %v170, 2
    %v545 = vrot.slane %v187, 2
    %vm546 = vcmp.lt.s32.totalorder %v75, 6
    %v547 = vsel %vm546, %v544, %v545
    %v548 = vsel %vm546, %v543, %v544
    %v549 = vsel %vm546, %v542, %v543
    %v550 = vsel %vm546, %v545, %v542
    %v551 = vsel %vm83, 0.0, %v549
    %v552 = vsel %vm84, 0.0, %v548
    %v553 = vsel %vm85, 0.0, %v547
    %v554 = vsel %vm86, 0.0, %v550
    %556 = vset.pattern.permute.xlu0 0
    %557 = vperm.xlu0 %556, %v551
    %v558 = vpop.permute.xlu0 %557
    %561 = vset.pattern.permute.xlu0 0
    %562 = vperm.xlu0 %561, %v552
    %v563 = vpop.permute.xlu0 %562
    %566 = vset.pattern.permute.xlu0 0
    %567 = vperm.xlu0 %566, %v553
    %v568 = vpop.permute.xlu0 %567
    %571 = vset.pattern.permute.xlu0 0
    %572 = vperm.xlu0 %571, %v554
    %v573 = vpop.permute.xlu0 %572
    %v575 = vlaneseq
    %v576 = vshrl.u32 %v575, 7
    %v577 = vsub.s32 2, %v576
    %v578 = vrot.slane %v103, %v577
    %v579 = vmul.f32 %v558, %v578
    %v580 = vmul.f32 %v563, %v578
    %v581 = vmul.f32 %v568, %v578
    %v582 = vmul.f32 %v573, %v578
    %v583 = vadd.f32 %v538, %v579
    %v584 = vadd.f32 %v539, %v580
    %v585 = vadd.f32 %v540, %v581
    %v586 = vadd.f32 %v541, %v582
    %v588 = vlaneseq
    %v589 = vshrl.u32 %v588, 7
    %v590 = vsub.s32 0, %v589
    %v591 = vrot.slane %v69, %v590
    %v593 = vadd.f32 %v583, %v591
    %v594 = vadd.f32 %v584, %v591
    %v595 = vadd.f32 %v585, %v591
    %v596 = vadd.f32 %v586, %v591
    %v597 = vmax.f32 %v593, 0.0
    %v598 = vmax.f32 %v594, 0.0
    %v599 = vmax.f32 %v595, 0.0
    %v600 = vmax.f32 %v596, 0.0
    %v601 = vrot.slane %v597, 6
    %v602 = vrot.slane %v598, 6
    %v603 = vrot.slane %v599, 6
    %v604 = vrot.slane %v600, 6
    %v605 = vsel %vm79, %v603, %v604
    %v606 = vsel %vm79, %v602, %v603
    %v607 = vsel %vm79, %v601, %v602
    %v608 = vsel %vm79, %v604, %v601
    %v609 = vsel %vm79, 1, 0
    %v610 = vsel %vm80, 1, 0
    %v611 = vsel %vm81, 1, 0
    %v612 = vsel %vm82, 1, 0
    %vm613 = vcmp.eq.s32.totalorder %v609, 1
    %vm614 = vcmp.eq.s32.totalorder %v610, 1
    %vm615 = vcmp.eq.s32.totalorder %v611, 1
    %vm616 = vcmp.eq.s32.totalorder %v612, 1
    %v617 = vsel %vm613, 0.0, %v608
    %v618 = vsel %vm614, 0.0, %v607
    %v619 = vsel %vm615, 0.0, %v606
    %v620 = vsel %vm616, 0.0, %v605
    %v621 = vpack.c.bf16 %v618, %v617
    %v622 = vpack.c.bf16 %v620, %v619
    %v623 = vpack.c.bf16 %v598, %v597
    %v624 = vpack.c.bf16 %v600, %v599
    %v625 = vrot.slane %v597, 2
    %v626 = vrot.slane %v598, 2
    %v627 = vrot.slane %v599, 2
    %v628 = vrot.slane %v600, 2
    %v629 = vsel %vm546, %v627, %v628
    %v630 = vsel %vm546, %v626, %v627
    %v631 = vsel %vm546, %v625, %v626
    %v632 = vsel %vm546, %v628, %v625
    %v633 = vsel %vm83, 1, 0
    %v634 = vsel %vm84, 1, 0
    %v635 = vsel %vm85, 1, 0
    %v636 = vsel %vm86, 1, 0
    %vm637 = vcmp.eq.s32.totalorder %v633, 1
    %vm638 = vcmp.eq.s32.totalorder %v634, 1
    %vm639 = vcmp.eq.s32.totalorder %v635, 1
    %vm640 = vcmp.eq.s32.totalorder %v636, 1
    %v641 = vsel %vm637, 0.0, %v631
    %v642 = vsel %vm638, 0.0, %v630
    %v643 = vsel %vm639, 0.0, %v629
    %v644 = vsel %vm640, 0.0, %v632
    %v645 = vpack.c.bf16 %v642, %v641
    %v646 = vpack.c.bf16 %v644, %v643
    %v647 = vld [vmem:[%s2] sm:$0xf]
    %v648 = vld [vmem:[%s2 + $0x4] sm:$0xf]
    %s649 = scalar_lea.vmem %s2, 8
    %v650 = vld [vmem:[%s649] sm:$0xf]
    %v651 = vld [vmem:[%s649 + $0x4] sm:$0xf]
    %v654 = vunpack.c.l.b16 %v650
    %v655 = vunpack.c.l.b16 %v651
    %v656 = vpack.c.b16 %v655, %v654
    %vm658 = vcmask 130048
    %v660 = vsel %vm658, %v623, 0
    %v663 = vsel %vm658, %v624, 0
    %665 = vmatprep.subr.bf16.mxu0 0
    %666 = vmatpush1.bf16.msra.mxu0 %v656
    %667 = vmatprep.subr.bf16.mxu0 0
    %668 = vmatpush1.bf16.msra.mxu0 0
    %669 = vmatprep.subr.bf16.mxu0 0
    %670 = vmatpush1.bf16.msra.mxu0 0
    %671 = vmatprep.subr.bf16.mxu0 0
    %672 = vmatpush1.bf16.msra.mxu0 0
    %673 = vmatprep.subr.bf16.mxu0 0
    %674 = vmatpush1.bf16.msra.mxu0 0
    %675 = vmatprep.subr.bf16.mxu0 0
    %676 = vmatpush1.bf16.msra.mxu0 0
    %677 = vmatprep.subr.bf16.mxu0 0
    %678 = vmatpush1.bf16.msra.mxu0 0
    %679 = vmatprep.subr.bf16.mxu0 0
    %680 = vmatpush1.bf16.msra.mxu0 0
    %681 = vmatprep.subr.bf16.mxu0 0
    %682 = vmatpush1.bf16.msra.mxu0 0
    %683 = vmatprep.subr.bf16.mxu0 0
    %684 = vmatpush1.bf16.msra.mxu0 0
    %685 = vmatprep.subr.bf16.mxu0 0
    %686 = vmatpush1.bf16.msra.mxu0 0
    %687 = vmatprep.subr.bf16.mxu0 0
    %688 = vmatpush1.bf16.msra.mxu0 0
    %689 = vmatprep.subr.bf16.mxu0 0
    %690 = vmatpush1.bf16.msra.mxu0 0
    %691 = vmatprep.subr.bf16.mxu0 0
    %692 = vmatpush1.bf16.msra.mxu0 0
    %693 = vmatprep.subr.bf16.mxu0 0
    %694 = vmatpush1.bf16.msra.mxu0 0
    %695 = vmatprep.subr.bf16.mxu0 0
    %696 = vmatpush1.bf16.msra.mxu0 0
    %697 = vmatprep.mubr.bf16.mxu0 0
    %698 = vmatmul.mubr.bf16.gmra.mrb[0].mxu0 %v660
    %v699 = vpop.f32.mrb[0].mxu0
    %v700 = vadd.f32 0.0, %v699
    %v701 = vpop.f32.mrb[0].mxu0
    %v702 = vpop.f32.mrb[0].mxu0
    %v703 = vadd.f32 0.0, %v702
    %v704 = vpop.f32.mrb[0].mxu0
    %705 = vmatprep.mubr.bf16.mxu0 0
    %706 = vmatmul.mubr.bf16.gmra.mrb[0].mxu0 %v663
    %v707 = vpop.f32.mrb[0].mxu0
    %v708 = vadd.f32 0.0, %v707
    %v709 = vpop.f32.mrb[0].mxu0
    %v710 = vpop.f32.mrb[0].mxu0
    %v711 = vadd.f32 0.0, %v710
    %v712 = vpop.f32.mrb[0].mxu0
    %713 = vdwg.mxu0
    %v716 = vunpack.c.l.b16 %v647
    %v717 = vunpack.c.l.b16 %v648
    %v718 = vpack.c.b16 %v717, %v716
    %v721 = vsel %vm658, %v621, 0
    %v724 = vsel %vm658, %v622, 0
    %726 = vmatprep.subr.bf16.mxu0 0
    %727 = vmatpush1.bf16.msra.mxu0 %v718
    %728 = vmatprep.subr.bf16.mxu0 0
    %729 = vmatpush1.bf16.msra.mxu0 0
    %730 = vmatprep.subr.bf16.mxu0 0
    %731 = vmatpush1.bf16.msra.mxu0 0
    %732 = vmatprep.subr.bf16.mxu0 0
    %733 = vmatpush1.bf16.msra.mxu0 0
    %734 = vmatprep.subr.bf16.mxu0 0
    %735 = vmatpush1.bf16.msra.mxu0 0
    %736 = vmatprep.subr.bf16.mxu0 0
    %737 = vmatpush1.bf16.msra.mxu0 0
    %738 = vmatprep.subr.bf16.mxu0 0
    %739 = vmatpush1.bf16.msra.mxu0 0
    %740 = vmatprep.subr.bf16.mxu0 0
    %741 = vmatpush1.bf16.msra.mxu0 0
    %742 = vmatprep.subr.bf16.mxu0 0
    %743 = vmatpush1.bf16.msra.mxu0 0
    %744 = vmatprep.subr.bf16.mxu0 0
    %745 = vmatpush1.bf16.msra.mxu0 0
    %746 = vmatprep.subr.bf16.mxu0 0
    %747 = vmatpush1.bf16.msra.mxu0 0
    %748 = vmatprep.subr.bf16.mxu0 0
    %749 = vmatpush1.bf16.msra.mxu0 0
    %750 = vmatprep.subr.bf16.mxu0 0
    %751 = vmatpush1.bf16.msra.mxu0 0
    %752 = vmatprep.subr.bf16.mxu0 0
    %753 = vmatpush1.bf16.msra.mxu0 0
    %754 = vmatprep.subr.bf16.mxu0 0
    %755 = vmatpush1.bf16.msra.mxu0 0
    %756 = vmatprep.subr.bf16.mxu0 0
    %757 = vmatpush1.bf16.msra.mxu0 0
    %758 = vmatprep.mubr.bf16.mxu0 0
    %759 = vmatmul.mubr.bf16.gmra.mrb[0].mxu0 %v721
    %v760 = vpop.f32.mrb[0].mxu0
    %v761 = vadd.f32 %v700, %v760
    %v762 = vpop.f32.mrb[0].mxu0
    %v763 = vpop.f32.mrb[0].mxu0
    %v764 = vadd.f32 %v703, %v763
    %v765 = vpop.f32.mrb[0].mxu0
    %766 = vmatprep.mubr.bf16.mxu0 0
    %767 = vmatmul.mubr.bf16.gmra.mrb[0].mxu0 %v724
    %v768 = vpop.f32.mrb[0].mxu0
    %v769 = vadd.f32 %v708, %v768
    %v770 = vpop.f32.mrb[0].mxu0
    %v771 = vpop.f32.mrb[0].mxu0
    %v772 = vadd.f32 %v711, %v771
    %v773 = vpop.f32.mrb[0].mxu0
    %774 = vdwg.mxu0
    %s775 = scalar_lea.vmem %s2, 16
    %v776 = vld [vmem:[%s775] sm:$0xf]
    %v777 = vld [vmem:[%s775 + $0x4] sm:$0xf]
    %v780 = vunpack.c.l.b16 %v776
    %v781 = vunpack.c.l.b16 %v777
    %v782 = vpack.c.b16 %v781, %v780
    %v785 = vsel %vm658, %v645, 0
    %v788 = vsel %vm658, %v646, 0
    %790 = vmatprep.subr.bf16.mxu0 0
    %791 = vmatpush1.bf16.msra.mxu0 %v782
    %792 = vmatprep.subr.bf16.mxu0 0
    %793 = vmatpush1.bf16.msra.mxu0 0
    %794 = vmatprep.subr.bf16.mxu0 0
    %795 = vmatpush1.bf16.msra.mxu0 0
    %796 = vmatprep.subr.bf16.mxu0 0
    %797 = vmatpush1.bf16.msra.mxu0 0
    %798 = vmatprep.subr.bf16.mxu0 0
    %799 = vmatpush1.bf16.msra.mxu0 0
    %800 = vmatprep.subr.bf16.mxu0 0
    %801 = vmatpush1.bf16.msra.mxu0 0
    %802 = vmatprep.subr.bf16.mxu0 0
    %803 = vmatpush1.bf16.msra.mxu0 0
    %804 = vmatprep.subr.bf16.mxu0 0
    %805 = vmatpush1.bf16.msra.mxu0 0
    %806 = vmatprep.subr.bf16.mxu0 0
    %807 = vmatpush1.bf16.msra.mxu0 0
    %808 = vmatprep.subr.bf16.mxu0 0
    %809 = vmatpush1.bf16.msra.mxu0 0
    %810 = vmatprep.subr.bf16.mxu0 0
    %811 = vmatpush1.bf16.msra.mxu0 0
    %812 = vmatprep.subr.bf16.mxu0 0
    %813 = vmatpush1.bf16.msra.mxu0 0
    %814 = vmatprep.subr.bf16.mxu0 0
    %815 = vmatpush1.bf16.msra.mxu0 0
    %816 = vmatprep.subr.bf16.mxu0 0
    %817 = vmatpush1.bf16.msra.mxu0 0
    %818 = vmatprep.subr.bf16.mxu0 0
    %819 = vmatpush1.bf16.msra.mxu0 0
    %820 = vmatprep.subr.bf16.mxu0 0
    %821 = vmatpush1.bf16.msra.mxu0 0
    %822 = vmatprep.mubr.bf16.mxu0 0
    %823 = vmatmul.mubr.bf16.gmra.mrb[0].mxu0 %v785
    %v824 = vpop.f32.mrb[0].mxu0
    %v825 = vadd.f32 0.0, %v824
    %v826 = vpop.f32.mrb[0].mxu0
    %v827 = vpop.f32.mrb[0].mxu0
    %v828 = vadd.f32 0.0, %v827
    %v829 = vpop.f32.mrb[0].mxu0
    %830 = vmatprep.mubr.bf16.mxu0 0
    %831 = vmatmul.mubr.bf16.gmra.mrb[0].mxu0 %v788
    %v832 = vpop.f32.mrb[0].mxu0
    %v833 = vadd.f32 0.0, %v832
    %v834 = vpop.f32.mrb[0].mxu0
    %v835 = vpop.f32.mrb[0].mxu0
    %v836 = vadd.f32 0.0, %v835
    %v837 = vpop.f32.mrb[0].mxu0
    %838 = vdwg.mxu0
    %v839 = vadd.f32 %v761, %v825
    %v840 = vadd.f32 %v764, %v828
    %v841 = vadd.f32 %v769, %v833
    %v842 = vadd.f32 %v772, %v836
    %v844 = vlaneseq
    %v845 = vshrl.u32 %v844, 7
    %v846 = vsub.s32 0, %v845
    %v847 = vrot.slane %v70, %v846
    %v849 = vadd.f32 %v839, %v847
    %v850 = vadd.f32 %v840, %v847
    %v851 = vadd.f32 %v841, %v847
    %v852 = vadd.f32 %v842, %v847
    %v853 = vmax.f32 %v849, 0.0
    %v854 = vmax.f32 %v850, 0.0
    %v855 = vmax.f32 %v851, 0.0
    %v856 = vmax.f32 %v852, 0.0
    %v857 = vrot.slane %v853, 6
    %v858 = vrot.slane %v854, 6
    %v859 = vrot.slane %v855, 6
    %v860 = vrot.slane %v856, 6
    %v861 = vsel %vm79, %v859, %v860
    %v862 = vsel %vm79, %v858, %v859
    %v863 = vsel %vm79, %v857, %v858
    %v864 = vsel %vm79, %v860, %v857
    %v865 = vsel %vm613, 0.0, %v864
    %v866 = vsel %vm614, 0.0, %v863
    %v867 = vsel %vm615, 0.0, %v862
    %v868 = vsel %vm616, 0.0, %v861
    %v869 = vpack.c.bf16 %v866, %v865
    %v870 = vpack.c.bf16 %v868, %v867
    %v871 = vpack.c.bf16 %v854, %v853
    %v872 = vpack.c.bf16 %v856, %v855
    %v873 = vrot.slane %v853, 2
    %v874 = vrot.slane %v854, 2
    %v875 = vrot.slane %v855, 2
    %v876 = vrot.slane %v856, 2
    %v877 = vsel %vm546, %v875, %v876
    %v878 = vsel %vm546, %v874, %v875
    %v879 = vsel %vm546, %v873, %v874
    %v880 = vsel %vm546, %v876, %v873
    %v881 = vsel %vm637, 0.0, %v879
    %v882 = vsel %vm638, 0.0, %v878
    %v883 = vsel %vm639, 0.0, %v877
    %v884 = vsel %vm640, 0.0, %v880
    %v885 = vpack.c.bf16 %v882, %v881
    %v886 = vpack.c.bf16 %v884, %v883
    %v887 = vld [vmem:[#allocation2] sm:$0xf]
    %v888 = vld [vmem:[#allocation2 + $0x4] sm:$0xf]
    %v889 = vld [vmem:[#allocation2 + $0x8] sm:$0xf]
    %v890 = vld [vmem:[#allocation2 + $0xc] sm:$0xf]
    %s891 = scalar_lea.vmem [#allocation2], 16
    %v892 = vld [vmem:[%s891] sm:$0xf]
    %v893 = vld [vmem:[%s891 + $0x4] sm:$0xf]
    %v894 = vld [vmem:[%s891 + $0x8] sm:$0xf]
    %v895 = vld [vmem:[%s891 + $0xc] sm:$0xf]
    %v900 = vunpack.c.l.b16 %v892
    %v901 = vunpack.c.l.b16 %v893
    %v902 = vunpack.c.l.b16 %v894
    %v903 = vunpack.c.l.b16 %v895
    %v904 = vpack.c.b16 %v901, %v900
    %v905 = vpack.c.b16 %v903, %v902
    %vm908 = vcmask 261120
    %v910 = vsel %vm908, %v871, 0
    %v913 = vsel %vm908, %v872, 0
    %915 = vmatprep.subr.bf16.mxu0 0
    %916 = vmatpush1.bf16.msra.mxu0 %v904
    %917 = vmatprep.subr.bf16.mxu0 0
    %918 = vmatpush1.bf16.msra.mxu0 %v905
    %919 = vmatprep.subr.bf16.mxu0 0
    %920 = vmatpush1.bf16.msra.mxu0 0
    %921 = vmatprep.subr.bf16.mxu0 0
    %922 = vmatpush1.bf16.msra.mxu0 0
    %923 = vmatprep.subr.bf16.mxu0 0
    %924 = vmatpush1.bf16.msra.mxu0 0
    %925 = vmatprep.subr.bf16.mxu0 0
    %926 = vmatpush1.bf16.msra.mxu0 0
    %927 = vmatprep.subr.bf16.mxu0 0
    %928 = vmatpush1.bf16.msra.mxu0 0
    %929 = vmatprep.subr.bf16.mxu0 0
    %930 = vmatpush1.bf16.msra.mxu0 0
    %931 = vmatprep.subr.bf16.mxu0 0
    %932 = vmatpush1.bf16.msra.mxu0 0
    %933 = vmatprep.subr.bf16.mxu0 0
    %934 = vmatpush1.bf16.msra.mxu0 0
    %935 = vmatprep.subr.bf16.mxu0 0
    %936 = vmatpush1.bf16.msra.mxu0 0
    %937 = vmatprep.subr.bf16.mxu0 0
    %938 = vmatpush1.bf16.msra.mxu0 0
    %939 = vmatprep.subr.bf16.mxu0 0
    %940 = vmatpush1.bf16.msra.mxu0 0
    %941 = vmatprep.subr.bf16.mxu0 0
    %942 = vmatpush1.bf16.msra.mxu0 0
    %943 = vmatprep.subr.bf16.mxu0 0
    %944 = vmatpush1.bf16.msra.mxu0 0
    %945 = vmatprep.subr.bf16.mxu0 0
    %946 = vmatpush1.bf16.msra.mxu0 0
    %947 = vmatprep.mubr.bf16.mxu0 0
    %948 = vmatmul.mubr.bf16.gmra.mrb[0].mxu0 %v910
    %v949 = vpop.f32.mrb[0].mxu0
    %v950 = vadd.f32 0.0, %v949
    %v951 = vpop.f32.mrb[0].mxu0
    %v952 = vpop.f32.mrb[0].mxu0
    %v953 = vadd.f32 0.0, %v952
    %v954 = vpop.f32.mrb[0].mxu0
    %955 = vmatprep.mubr.bf16.mxu0 0
    %956 = vmatmul.mubr.bf16.gmra.mrb[0].mxu0 %v913
    %v957 = vpop.f32.mrb[0].mxu0
    %v958 = vadd.f32 0.0, %v957
    %v959 = vpop.f32.mrb[0].mxu0
    %v960 = vpop.f32.mrb[0].mxu0
    %v961 = vadd.f32 0.0, %v960
    %v962 = vpop.f32.mrb[0].mxu0
    %963 = vdwg.mxu0
    %v968 = vunpack.c.l.b16 %v887
    %v969 = vunpack.c.l.b16 %v888
    %v970 = vunpack.c.l.b16 %v889
    %v971 = vunpack.c.l.b16 %v890
    %v972 = vpack.c.b16 %v969, %v968
    %v973 = vpack.c.b16 %v971, %v970
    %v977 = vsel %vm908, %v869, 0
    %v980 = vsel %vm908, %v870, 0
    %982 = vmatprep.subr.bf16.mxu0 0
    %983 = vmatpush1.bf16.msra.mxu0 %v972
    %984 = vmatprep.subr.bf16.mxu0 0
    %985 = vmatpush1.bf16.msra.mxu0 %v973
    %986 = vmatprep.subr.bf16.mxu0 0
    %987 = vmatpush1.bf16.msra.mxu0 0
    %988 = vmatprep.subr.bf16.mxu0 0
    %989 = vmatpush1.bf16.msra.mxu0 0
    %990 = vmatprep.subr.bf16.mxu0 0
    %991 = vmatpush1.bf16.msra.mxu0 0
    %992 = vmatprep.subr.bf16.mxu0 0
    %993 = vmatpush1.bf16.msra.mxu0 0
    %994 = vmatprep.subr.bf16.mxu0 0
    %995 = vmatpush1.bf16.msra.mxu0 0
    %996 = vmatprep.subr.bf16.mxu0 0
    %997 = vmatpush1.bf16.msra.mxu0 0
    %998 = vmatprep.subr.bf16.mxu0 0
    %999 = vmatpush1.bf16.msra.mxu0 0
    %1000 = vmatprep.subr.bf16.mxu0 0
    %1001 = vmatpush1.bf16.msra.mxu0 0
    %1002 = vmatprep.subr.bf16.mxu0 0
    %1003 = vmatpush1.bf16.msra.mxu0 0
    %1004 = vmatprep.subr.bf16.mxu0 0
    %1005 = vmatpush1.bf16.msra.mxu0 0
    %1006 = vmatprep.subr.bf16.mxu0 0
    %1007 = vmatpush1.bf16.msra.mxu0 0
    %1008 = vmatprep.subr.bf16.mxu0 0
    %1009 = vmatpush1.bf16.msra.mxu0 0
    %1010 = vmatprep.subr.bf16.mxu0 0
    %1011 = vmatpush1.bf16.msra.mxu0 0
    %1012 = vmatprep.subr.bf16.mxu0 0
    %1013 = vmatpush1.bf16.msra.mxu0 0
    %1014 = vmatprep.mubr.bf16.mxu0 0
    %1015 = vmatmul.mubr.bf16.gmra.mrb[0].mxu0 %v977
    %v1016 = vpop.f32.mrb[0].mxu0
    %v1017 = vadd.f32 %v950, %v1016
    %v1018 = vpop.f32.mrb[0].mxu0
    %v1019 = vpop.f32.mrb[0].mxu0
    %v1020 = vadd.f32 %v953, %v1019
    %v1021 = vpop.f32.mrb[0].mxu0
    %1022 = vmatprep.mubr.bf16.mxu0 0
    %1023 = vmatmul.mubr.bf16.gmra.mrb[0].mxu0 %v980
    %v1024 = vpop.f32.mrb[0].mxu0
    %v1025 = vadd.f32 %v958, %v1024
    %v1026 = vpop.f32.mrb[0].mxu0
    %v1027 = vpop.f32.mrb[0].mxu0
    %v1028 = vadd.f32 %v961, %v1027
    %v1029 = vpop.f32.mrb[0].mxu0
    %1030 = vdwg.mxu0
    %s1031 = scalar_lea.vmem [#allocation2], 32
    %v1032 = vld [vmem:[%s1031] sm:$0xf]
    %v1033 = vld [vmem:[%s1031 + $0x4] sm:$0xf]
    %v1034 = vld [vmem:[%s1031 + $0x8] sm:$0xf]
    %v1035 = vld [vmem:[%s1031 + $0xc] sm:$0xf]
    %v1040 = vunpack.c.l.b16 %v1032
    %v1041 = vunpack.c.l.b16 %v1033
    %v1042 = vunpack.c.l.b16 %v1034
    %v1043 = vunpack.c.l.b16 %v1035
    %v1044 = vpack.c.b16 %v1041, %v1040
    %v1045 = vpack.c.b16 %v1043, %v1042
    %v1049 = vsel %vm908, %v885, 0
    %v1052 = vsel %vm908, %v886, 0
    %1054 = vmatprep.subr.bf16.mxu0 0
    %1055 = vmatpush1.bf16.msra.mxu0 %v1044
    %1056 = vmatprep.subr.bf16.mxu0 0
    %1057 = vmatpush1.bf16.msra.mxu0 %v1045
    %1058 = vmatprep.subr.bf16.mxu0 0
    %1059 = vmatpush1.bf16.msra.mxu0 0
    %1060 = vmatprep.subr.bf16.mxu0 0
    %1061 = vmatpush1.bf16.msra.mxu0 0
    %1062 = vmatprep.subr.bf16.mxu0 0
    %1063 = vmatpush1.bf16.msra.mxu0 0
    %1064 = vmatprep.subr.bf16.mxu0 0
    %1065 = vmatpush1.bf16.msra.mxu0 0
    %1066 = vmatprep.subr.bf16.mxu0 0
    %1067 = vmatpush1.bf16.msra.mxu0 0
    %1068 = vmatprep.subr.bf16.mxu0 0
    %1069 = vmatpush1.bf16.msra.mxu0 0
    %1070 = vmatprep.subr.bf16.mxu0 0
    %1071 = vmatpush1.bf16.msra.mxu0 0
    %1072 = vmatprep.subr.bf16.mxu0 0
    %1073 = vmatpush1.bf16.msra.mxu0 0
    %1074 = vmatprep.subr.bf16.mxu0 0
    %1075 = vmatpush1.bf16.msra.mxu0 0
    %1076 = vmatprep.subr.bf16.mxu0 0
    %1077 = vmatpush1.bf16.msra.mxu0 0
    %1078 = vmatprep.subr.bf16.mxu0 0
    %1079 = vmatpush1.bf16.msra.mxu0 0
    %1080 = vmatprep.subr.bf16.mxu0 0
    %1081 = vmatpush1.bf16.msra.mxu0 0
    %1082 = vmatprep.subr.bf16.mxu0 0
    %1083 = vmatpush1.bf16.msra.mxu0 0
    %1084 = vmatprep.subr.bf16.mxu0 0
    %1085 = vmatpush1.bf16.msra.mxu0 0
    %1086 = vmatprep.mubr.bf16.mxu0 0
    %1087 = vmatmul.mubr.bf16.gmra.mrb[0].mxu0 %v1049
    %v1088 = vpop.f32.mrb[0].mxu0
    %v1089 = vadd.f32 0.0, %v1088
    %v1090 = vpop.f32.mrb[0].mxu0
    %v1091 = vpop.f32.mrb[0].mxu0
    %v1092 = vadd.f32 0.0, %v1091
    %v1093 = vpop.f32.mrb[0].mxu0
    %1094 = vmatprep.mubr.bf16.mxu0 0
    %1095 = vmatmul.mubr.bf16.gmra.mrb[0].mxu0 %v1052
    %v1096 = vpop.f32.mrb[0].mxu0
    %v1097 = vadd.f32 0.0, %v1096
    %v1098 = vpop.f32.mrb[0].mxu0
    %v1099 = vpop.f32.mrb[0].mxu0
    %v1100 = vadd.f32 0.0, %v1099
    %v1101 = vpop.f32.mrb[0].mxu0
    %1102 = vdwg.mxu0
    %v1103 = vadd.f32 %v1017, %v1089
    %v1104 = vadd.f32 %v1020, %v1092
    %v1105 = vadd.f32 %v1025, %v1097
    %v1106 = vadd.f32 %v1028, %v1100
    %v1108 = vlaneseq
    %v1109 = vshrl.u32 %v1108, 7
    %v1110 = vsub.s32 0, %v1109
    %v1111 = vrot.slane %v71, %v1110
    %v1113 = vadd.f32 %v1103, %v1111
    %v1114 = vadd.f32 %v1104, %v1111
    %v1115 = vadd.f32 %v1105, %v1111
    %v1116 = vadd.f32 %v1106, %v1111
    %v1117 = vmax.f32 %v1113, 0.0
    %v1118 = vmax.f32 %v1114, 0.0
    %v1119 = vmax.f32 %v1115, 0.0
    %v1120 = vmax.f32 %v1116, 0.0
    %v1121 = vpack.c.bf16 %v1118, %v1117
    %v1122 = vpack.c.bf16 %v1120, %v1119
    %v1123 = vld [vmem:[#allocation5] sm:$0xf]
    %v1124 = vld [vmem:[#allocation5 + $0x4] sm:$0xf]
    %v1125 = vld [vmem:[#allocation5 + $0x8] sm:$0xf]
    %v1126 = vld [vmem:[#allocation5 + $0xc] sm:$0xf]
    %v1127 = vld [vmem:[#allocation5 + $0x10] sm:$0xf]
    %v1128 = vld [vmem:[#allocation5 + $0x14] sm:$0xf]
    %v1129 = vld [vmem:[#allocation5 + $0x18] sm:$0xf]
    %v1130 = vld [vmem:[#allocation5 + $0x1c] sm:$0xf]
    %s1131 = scalar_lea.vmem [#allocation5], 32
    %v1132 = vld [vmem:[%s1131] sm:$0xf]
    %v1133 = vld [vmem:[%s1131 + $0x4] sm:$0xf]
    %v1134 = vld [vmem:[%s1131 + $0x8] sm:$0xf]
    %v1135 = vld [vmem:[%s1131 + $0xc] sm:$0xf]
    %v1136 = vld [vmem:[%s1131 + $0x10] sm:$0xf]
    %v1137 = vld [vmem:[%s1131 + $0x14] sm:$0xf]
    %v1138 = vld [vmem:[%s1131 + $0x18] sm:$0xf]
    %v1139 = vld [vmem:[%s1131 + $0x1c] sm:$0xf]
    %v1141 = vrot.slane %v1121, 1
    %v1150 = vunpack.c.l.b16 %v1132
    %v1151 = vunpack.c.l.b16 %v1133
    %v1152 = vunpack.c.l.b16 %v1134
    %v1153 = vunpack.c.l.b16 %v1135
    %v1154 = vunpack.c.l.b16 %v1136
    %v1155 = vunpack.c.l.b16 %v1137
    %v1156 = vunpack.c.l.b16 %v1138
    %v1157 = vunpack.c.l.b16 %v1139
    %v1158 = vpack.c.b16 %v1151, %v1150
    %v1159 = vpack.c.b16 %v1153, %v1152
    %v1160 = vpack.c.b16 %v1155, %v1154
    %v1161 = vpack.c.b16 %v1157, %v1156
    %vm1166 = vcmask 523264
    %v1168 = vsel %vm1166, %v1141, 0
    %1170 = vmatprep.subr.bf16.mxu0 0
    %1171 = vmatpush1.bf16.msra.mxu0 %v1158
    %1172 = vmatprep.subr.bf16.mxu0 0
    %1173 = vmatpush1.bf16.msra.mxu0 %v1159
    %1174 = vmatprep.subr.bf16.mxu0 0
    %1175 = vmatpush1.bf16.msra.mxu0 %v1160
    %1176 = vmatprep.subr.bf16.mxu0 0
    %1177 = vmatpush1.bf16.msra.mxu0 %v1161
    %1178 = vmatprep.subr.bf16.mxu0 0
    %1179 = vmatpush1.bf16.msra.mxu0 0
    %1180 = vmatprep.subr.bf16.mxu0 0
    %1181 = vmatpush1.bf16.msra.mxu0 0
    %1182 = vmatprep.subr.bf16.mxu0 0
    %1183 = vmatpush1.bf16.msra.mxu0 0
    %1184 = vmatprep.subr.bf16.mxu0 0
    %1185 = vmatpush1.bf16.msra.mxu0 0
    %1186 = vmatprep.subr.bf16.mxu0 0
    %1187 = vmatpush1.bf16.msra.mxu0 0
    %1188 = vmatprep.subr.bf16.mxu0 0
    %1189 = vmatpush1.bf16.msra.mxu0 0
    %1190 = vmatprep.subr.bf16.mxu0 0
    %1191 = vmatpush1.bf16.msra.mxu0 0
    %1192 = vmatprep.subr.bf16.mxu0 0
    %1193 = vmatpush1.bf16.msra.mxu0 0
    %1194 = vmatprep.subr.bf16.mxu0 0
    %1195 = vmatpush1.bf16.msra.mxu0 0
    %1196 = vmatprep.subr.bf16.mxu0 0
    %1197 = vmatpush1.bf16.msra.mxu0 0
    %1198 = vmatprep.subr.bf16.mxu0 0
    %1199 = vmatpush1.bf16.msra.mxu0 0
    %1200 = vmatprep.subr.bf16.mxu0 0
    %1201 = vmatpush1.bf16.msra.mxu0 0
    %1202 = vmatprep.mubr.bf16.mxu0 0
    %1203 = vmatmul.mubr.bf16.gmra.mrb[0].mxu0 %v1168
    %v1204 = vpop.f32.mrb[0].mxu0
    %v1205 = vadd.f32 0.0, %v1204
    %v1206 = vpop.f32.mrb[0].mxu0
    %v1207 = vpop.f32.mrb[0].mxu0
    %v1208 = vpop.f32.mrb[0].mxu0
    %1209 = vdwg.mxu0
    %v1218 = vunpack.c.l.b16 %v1123
    %v1219 = vunpack.c.l.b16 %v1124
    %v1220 = vunpack.c.l.b16 %v1125
    %v1221 = vunpack.c.l.b16 %v1126
    %v1222 = vunpack.c.l.b16 %v1127
    %v1223 = vunpack.c.l.b16 %v1128
    %v1224 = vunpack.c.l.b16 %v1129
    %v1225 = vunpack.c.l.b16 %v1130
    %v1226 = vpack.c.b16 %v1219, %v1218
    %v1227 = vpack.c.b16 %v1221, %v1220
    %v1228 = vpack.c.b16 %v1223, %v1222
    %v1229 = vpack.c.b16 %v1225, %v1224
    %v1235 = vsel %vm1166, %v1121, 0
    %1237 = vmatprep.subr.bf16.mxu0 0
    %1238 = vmatpush1.bf16.msra.mxu0 %v1226
    %1239 = vmatprep.subr.bf16.mxu0 0
    %1240 = vmatpush1.bf16.msra.mxu0 %v1227
    %1241 = vmatprep.subr.bf16.mxu0 0
    %1242 = vmatpush1.bf16.msra.mxu0 %v1228
    %1243 = vmatprep.subr.bf16.mxu0 0
    %1244 = vmatpush1.bf16.msra.mxu0 %v1229
    %1245 = vmatprep.subr.bf16.mxu0 0
    %1246 = vmatpush1.bf16.msra.mxu0 0
    %1247 = vmatprep.subr.bf16.mxu0 0
    %1248 = vmatpush1.bf16.msra.mxu0 0
    %1249 = vmatprep.subr.bf16.mxu0 0
    %1250 = vmatpush1.bf16.msra.mxu0 0
    %1251 = vmatprep.subr.bf16.mxu0 0
    %1252 = vmatpush1.bf16.msra.mxu0 0
    %1253 = vmatprep.subr.bf16.mxu0 0
    %1254 = vmatpush1.bf16.msra.mxu0 0
    %1255 = vmatprep.subr.bf16.mxu0 0
    %1256 = vmatpush1.bf16.msra.mxu0 0
    %1257 = vmatprep.subr.bf16.mxu0 0
    %1258 = vmatpush1.bf16.msra.mxu0 0
    %1259 = vmatprep.subr.bf16.mxu0 0
    %1260 = vmatpush1.bf16.msra.mxu0 0
    %1261 = vmatprep.subr.bf16.mxu0 0
    %1262 = vmatpush1.bf16.msra.mxu0 0
    %1263 = vmatprep.subr.bf16.mxu0 0
    %1264 = vmatpush1.bf16.msra.mxu0 0
    %1265 = vmatprep.subr.bf16.mxu0 0
    %1266 = vmatpush1.bf16.msra.mxu0 0
    %1267 = vmatprep.subr.bf16.mxu0 0
    %1268 = vmatpush1.bf16.msra.mxu0 0
    %1269 = vmatprep.mubr.bf16.mxu0 0
    %1270 = vmatmul.mubr.bf16.gmra.mrb[0].mxu0 %v1235
    %v1271 = vpop.f32.mrb[0].mxu0
    %v1272 = vadd.f32 %v1205, %v1271
    %v1273 = vpop.f32.mrb[0].mxu0
    %v1274 = vpop.f32.mrb[0].mxu0
    %v1275 = vpop.f32.mrb[0].mxu0
    %1276 = vdwg.mxu0
    %s1277 = scalar_lea.vmem [#allocation5], 64
    %v1278 = vld [vmem:[%s1277] sm:$0xf]
    %v1279 = vld [vmem:[%s1277 + $0x4] sm:$0xf]
    %v1280 = vld [vmem:[%s1277 + $0x8] sm:$0xf]
    %v1281 = vld [vmem:[%s1277 + $0xc] sm:$0xf]
    %v1282 = vld [vmem:[%s1277 + $0x10] sm:$0xf]
    %v1283 = vld [vmem:[%s1277 + $0x14] sm:$0xf]
    %v1284 = vld [vmem:[%s1277 + $0x18] sm:$0xf]
    %v1285 = vld [vmem:[%s1277 + $0x1c] sm:$0xf]
    %v1286 = vrot.slane %v1121, 2
    %v1295 = vunpack.c.l.b16 %v1278
    %v1296 = vunpack.c.l.b16 %v1279
    %v1297 = vunpack.c.l.b16 %v1280
    %v1298 = vunpack.c.l.b16 %v1281
    %v1299 = vunpack.c.l.b16 %v1282
    %v1300 = vunpack.c.l.b16 %v1283
    %v1301 = vunpack.c.l.b16 %v1284
    %v1302 = vunpack.c.l.b16 %v1285
    %v1303 = vpack.c.b16 %v1296, %v1295
    %v1304 = vpack.c.b16 %v1298, %v1297
    %v1305 = vpack.c.b16 %v1300, %v1299
    %v1306 = vpack.c.b16 %v1302, %v1301
    %v1312 = vsel %vm1166, %v1286, 0
    %1314 = vmatprep.subr.bf16.mxu0 0
    %1315 = vmatpush1.bf16.msra.mxu0 %v1303
    %1316 = vmatprep.subr.bf16.mxu0 0
    %1317 = vmatpush1.bf16.msra.mxu0 %v1304
    %1318 = vmatprep.subr.bf16.mxu0 0
    %1319 = vmatpush1.bf16.msra.mxu0 %v1305
    %1320 = vmatprep.subr.bf16.mxu0 0
    %1321 = vmatpush1.bf16.msra.mxu0 %v1306
    %1322 = vmatprep.subr.bf16.mxu0 0
    %1323 = vmatpush1.bf16.msra.mxu0 0
    %1324 = vmatprep.subr.bf16.mxu0 0
    %1325 = vmatpush1.bf16.msra.mxu0 0
    %1326 = vmatprep.subr.bf16.mxu0 0
    %1327 = vmatpush1.bf16.msra.mxu0 0
    %1328 = vmatprep.subr.bf16.mxu0 0
    %1329 = vmatpush1.bf16.msra.mxu0 0
    %1330 = vmatprep.subr.bf16.mxu0 0
    %1331 = vmatpush1.bf16.msra.mxu0 0
    %1332 = vmatprep.subr.bf16.mxu0 0
    %1333 = vmatpush1.bf16.msra.mxu0 0
    %1334 = vmatprep.subr.bf16.mxu0 0
    %1335 = vmatpush1.bf16.msra.mxu0 0
    %1336 = vmatprep.subr.bf16.mxu0 0
    %1337 = vmatpush1.bf16.msra.mxu0 0
    %1338 = vmatprep.subr.bf16.mxu0 0
    %1339 = vmatpush1.bf16.msra.mxu0 0
    %1340 = vmatprep.subr.bf16.mxu0 0
    %1341 = vmatpush1.bf16.msra.mxu0 0
    %1342 = vmatprep.subr.bf16.mxu0 0
    %1343 = vmatpush1.bf16.msra.mxu0 0
    %1344 = vmatprep.subr.bf16.mxu0 0
    %1345 = vmatpush1.bf16.msra.mxu0 0
    %1346 = vmatprep.mubr.bf16.mxu0 0
    %1347 = vmatmul.mubr.bf16.gmra.mrb[0].mxu0 %v1312
    %v1348 = vpop.f32.mrb[0].mxu0
    %v1349 = vadd.f32 0.0, %v1348
    %v1350 = vpop.f32.mrb[0].mxu0
    %v1351 = vpop.f32.mrb[0].mxu0
    %v1352 = vpop.f32.mrb[0].mxu0
    %1353 = vdwg.mxu0
    %v1354 = vadd.f32 %v1272, %v1349
    %s1355 = scalar_lea.vmem [#allocation5], 96
    %v1356 = vld [vmem:[%s1355] sm:$0xf]
    %v1357 = vld [vmem:[%s1355 + $0x4] sm:$0xf]
    %v1358 = vld [vmem:[%s1355 + $0x8] sm:$0xf]
    %v1359 = vld [vmem:[%s1355 + $0xc] sm:$0xf]
    %v1360 = vld [vmem:[%s1355 + $0x10] sm:$0xf]
    %v1361 = vld [vmem:[%s1355 + $0x14] sm:$0xf]
    %v1362 = vld [vmem:[%s1355 + $0x18] sm:$0xf]
    %v1363 = vld [vmem:[%s1355 + $0x1c] sm:$0xf]
    %v1364 = vrot.slane %v1121, 3
    %v1373 = vunpack.c.l.b16 %v1356
    %v1374 = vunpack.c.l.b16 %v1357
    %v1375 = vunpack.c.l.b16 %v1358
    %v1376 = vunpack.c.l.b16 %v1359
    %v1377 = vunpack.c.l.b16 %v1360
    %v1378 = vunpack.c.l.b16 %v1361
    %v1379 = vunpack.c.l.b16 %v1362
    %v1380 = vunpack.c.l.b16 %v1363
    %v1381 = vpack.c.b16 %v1374, %v1373
    %v1382 = vpack.c.b16 %v1376, %v1375
    %v1383 = vpack.c.b16 %v1378, %v1377
    %v1384 = vpack.c.b16 %v1380, %v1379
    %v1390 = vsel %vm1166, %v1364, 0
    %1392 = vmatprep.subr.bf16.mxu0 0
    %1393 = vmatpush1.bf16.msra.mxu0 %v1381
    %1394 = vmatprep.subr.bf16.mxu0 0
    %1395 = vmatpush1.bf16.msra.mxu0 %v1382
    %1396 = vmatprep.subr.bf16.mxu0 0
    %1397 = vmatpush1.bf16.msra.mxu0 %v1383
    %1398 = vmatprep.subr.bf16.mxu0 0
    %1399 = vmatpush1.bf16.msra.mxu0 %v1384
    %1400 = vmatprep.subr.bf16.mxu0 0
    %1401 = vmatpush1.bf16.msra.mxu0 0
    %1402 = vmatprep.subr.bf16.mxu0 0
    %1403 = vmatpush1.bf16.msra.mxu0 0
    %1404 = vmatprep.subr.bf16.mxu0 0
    %1405 = vmatpush1.bf16.msra.mxu0 0
    %1406 = vmatprep.subr.bf16.mxu0 0
    %1407 = vmatpush1.bf16.msra.mxu0 0
    %1408 = vmatprep.subr.bf16.mxu0 0
    %1409 = vmatpush1.bf16.msra.mxu0 0
    %1410 = vmatprep.subr.bf16.mxu0 0
    %1411 = vmatpush1.bf16.msra.mxu0 0
    %1412 = vmatprep.subr.bf16.mxu0 0
    %1413 = vmatpush1.bf16.msra.mxu0 0
    %1414 = vmatprep.subr.bf16.mxu0 0
    %1415 = vmatpush1.bf16.msra.mxu0 0
    %1416 = vmatprep.subr.bf16.mxu0 0
    %1417 = vmatpush1.bf16.msra.mxu0 0
    %1418 = vmatprep.subr.bf16.mxu0 0
    %1419 = vmatpush1.bf16.msra.mxu0 0
    %1420 = vmatprep.subr.bf16.mxu0 0
    %1421 = vmatpush1.bf16.msra.mxu0 0
    %1422 = vmatprep.subr.bf16.mxu0 0
    %1423 = vmatpush1.bf16.msra.mxu0 0
    %1424 = vmatprep.mubr.bf16.mxu0 0
    %1425 = vmatmul.mubr.bf16.gmra.mrb[0].mxu0 %v1390
    %v1426 = vpop.f32.mrb[0].mxu0
    %v1427 = vadd.f32 0.0, %v1426
    %v1428 = vpop.f32.mrb[0].mxu0
    %v1429 = vpop.f32.mrb[0].mxu0
    %v1430 = vpop.f32.mrb[0].mxu0
    %1431 = vdwg.mxu0
    %v1432 = vadd.f32 %v1354, %v1427
    %s1433 = scalar_lea.vmem [#allocation5], 128
    %v1434 = vld [vmem:[%s1433] sm:$0xf]
    %v1435 = vld [vmem:[%s1433 + $0x4] sm:$0xf]
    %v1436 = vld [vmem:[%s1433 + $0x8] sm:$0xf]
    %v1437 = vld [vmem:[%s1433 + $0xc] sm:$0xf]
    %v1438 = vld [vmem:[%s1433 + $0x10] sm:$0xf]
    %v1439 = vld [vmem:[%s1433 + $0x14] sm:$0xf]
    %v1440 = vld [vmem:[%s1433 + $0x18] sm:$0xf]
    %v1441 = vld [vmem:[%s1433 + $0x1c] sm:$0xf]
    %v1442 = vrot.slane %v1121, 4
    %v1451 = vunpack.c.l.b16 %v1434
    %v1452 = vunpack.c.l.b16 %v1435
    %v1453 = vunpack.c.l.b16 %v1436
    %v1454 = vunpack.c.l.b16 %v1437
    %v1455 = vunpack.c.l.b16 %v1438
    %v1456 = vunpack.c.l.b16 %v1439
    %v1457 = vunpack.c.l.b16 %v1440
    %v1458 = vunpack.c.l.b16 %v1441
    %v1459 = vpack.c.b16 %v1452, %v1451
    %v1460 = vpack.c.b16 %v1454, %v1453
    %v1461 = vpack.c.b16 %v1456, %v1455
    %v1462 = vpack.c.b16 %v1458, %v1457
    %v1468 = vsel %vm1166, %v1442, 0
    %1470 = vmatprep.subr.bf16.mxu0 0
    %1471 = vmatpush1.bf16.msra.mxu0 %v1459
    %1472 = vmatprep.subr.bf16.mxu0 0
    %1473 = vmatpush1.bf16.msra.mxu0 %v1460
    %1474 = vmatprep.subr.bf16.mxu0 0
    %1475 = vmatpush1.bf16.msra.mxu0 %v1461
    %1476 = vmatprep.subr.bf16.mxu0 0
    %1477 = vmatpush1.bf16.msra.mxu0 %v1462
    %1478 = vmatprep.subr.bf16.mxu0 0
    %1479 = vmatpush1.bf16.msra.mxu0 0
    %1480 = vmatprep.subr.bf16.mxu0 0
    %1481 = vmatpush1.bf16.msra.mxu0 0
    %1482 = vmatprep.subr.bf16.mxu0 0
    %1483 = vmatpush1.bf16.msra.mxu0 0
    %1484 = vmatprep.subr.bf16.mxu0 0
    %1485 = vmatpush1.bf16.msra.mxu0 0
    %1486 = vmatprep.subr.bf16.mxu0 0
    %1487 = vmatpush1.bf16.msra.mxu0 0
    %1488 = vmatprep.subr.bf16.mxu0 0
    %1489 = vmatpush1.bf16.msra.mxu0 0
    %1490 = vmatprep.subr.bf16.mxu0 0
    %1491 = vmatpush1.bf16.msra.mxu0 0
    %1492 = vmatprep.subr.bf16.mxu0 0
    %1493 = vmatpush1.bf16.msra.mxu0 0
    %1494 = vmatprep.subr.bf16.mxu0 0
    %1495 = vmatpush1.bf16.msra.mxu0 0
    %1496 = vmatprep.subr.bf16.mxu0 0
    %1497 = vmatpush1.bf16.msra.mxu0 0
    %1498 = vmatprep.subr.bf16.mxu0 0
    %1499 = vmatpush1.bf16.msra.mxu0 0
    %1500 = vmatprep.subr.bf16.mxu0 0
    %1501 = vmatpush1.bf16.msra.mxu0 0
    %1502 = vmatprep.mubr.bf16.mxu0 0
    %1503 = vmatmul.mubr.bf16.gmra.mrb[0].mxu0 %v1468
    %v1504 = vpop.f32.mrb[0].mxu0
    %v1505 = vadd.f32 0.0, %v1504
    %v1506 = vpop.f32.mrb[0].mxu0
    %v1507 = vpop.f32.mrb[0].mxu0
    %v1508 = vpop.f32.mrb[0].mxu0
    %1509 = vdwg.mxu0
    %v1510 = vadd.f32 %v1432, %v1505
    %s1511 = scalar_lea.vmem [#allocation5], 160
    %v1512 = vld [vmem:[%s1511] sm:$0xf]
    %v1513 = vld [vmem:[%s1511 + $0x4] sm:$0xf]
    %v1514 = vld [vmem:[%s1511 + $0x8] sm:$0xf]
    %v1515 = vld [vmem:[%s1511 + $0xc] sm:$0xf]
    %v1516 = vld [vmem:[%s1511 + $0x10] sm:$0xf]
    %v1517 = vld [vmem:[%s1511 + $0x14] sm:$0xf]
    %v1518 = vld [vmem:[%s1511 + $0x18] sm:$0xf]
    %v1519 = vld [vmem:[%s1511 + $0x1c] sm:$0xf]
    %v1520 = vrot.slane %v1121, 5
    %v1529 = vunpack.c.l.b16 %v1512
    %v1530 = vunpack.c.l.b16 %v1513
    %v1531 = vunpack.c.l.b16 %v1514
    %v1532 = vunpack.c.l.b16 %v1515
    %v1533 = vunpack.c.l.b16 %v1516
    %v1534 = vunpack.c.l.b16 %v1517
    %v1535 = vunpack.c.l.b16 %v1518
    %v1536 = vunpack.c.l.b16 %v1519
    %v1537 = vpack.c.b16 %v1530, %v1529
    %v1538 = vpack.c.b16 %v1532, %v1531
    %v1539 = vpack.c.b16 %v1534, %v1533
    %v1540 = vpack.c.b16 %v1536, %v1535
    %v1546 = vsel %vm1166, %v1520, 0
    %1548 = vmatprep.subr.bf16.mxu0 0
    %1549 = vmatpush1.bf16.msra.mxu0 %v1537
    %1550 = vmatprep.subr.bf16.mxu0 0
    %1551 = vmatpush1.bf16.msra.mxu0 %v1538
    %1552 = vmatprep.subr.bf16.mxu0 0
    %1553 = vmatpush1.bf16.msra.mxu0 %v1539
    %1554 = vmatprep.subr.bf16.mxu0 0
    %1555 = vmatpush1.bf16.msra.mxu0 %v1540
    %1556 = vmatprep.subr.bf16.mxu0 0
    %1557 = vmatpush1.bf16.msra.mxu0 0
    %1558 = vmatprep.subr.bf16.mxu0 0
    %1559 = vmatpush1.bf16.msra.mxu0 0
    %1560 = vmatprep.subr.bf16.mxu0 0
    %1561 = vmatpush1.bf16.msra.mxu0 0
    %1562 = vmatprep.subr.bf16.mxu0 0
    %1563 = vmatpush1.bf16.msra.mxu0 0
    %1564 = vmatprep.subr.bf16.mxu0 0
    %1565 = vmatpush1.bf16.msra.mxu0 0
    %1566 = vmatprep.subr.bf16.mxu0 0
    %1567 = vmatpush1.bf16.msra.mxu0 0
    %1568 = vmatprep.subr.bf16.mxu0 0
    %1569 = vmatpush1.bf16.msra.mxu0 0
    %1570 = vmatprep.subr.bf16.mxu0 0
    %1571 = vmatpush1.bf16.msra.mxu0 0
    %1572 = vmatprep.subr.bf16.mxu0 0
    %1573 = vmatpush1.bf16.msra.mxu0 0
    %1574 = vmatprep.subr.bf16.mxu0 0
    %1575 = vmatpush1.bf16.msra.mxu0 0
    %1576 = vmatprep.subr.bf16.mxu0 0
    %1577 = vmatpush1.bf16.msra.mxu0 0
    %1578 = vmatprep.subr.bf16.mxu0 0
    %1579 = vmatpush1.bf16.msra.mxu0 0
    %1580 = vmatprep.mubr.bf16.mxu0 0
    %1581 = vmatmul.mubr.bf16.gmra.mrb[0].mxu0 %v1546
    %v1582 = vpop.f32.mrb[0].mxu0
    %v1583 = vadd.f32 0.0, %v1582
    %v1584 = vpop.f32.mrb[0].mxu0
    %v1585 = vpop.f32.mrb[0].mxu0
    %v1586 = vpop.f32.mrb[0].mxu0
    %1587 = vdwg.mxu0
    %v1588 = vadd.f32 %v1510, %v1583
    %s1589 = scalar_lea.vmem [#allocation5], 192
    %v1590 = vld [vmem:[%s1589] sm:$0xf]
    %v1591 = vld [vmem:[%s1589 + $0x4] sm:$0xf]
    %v1592 = vld [vmem:[%s1589 + $0x8] sm:$0xf]
    %v1593 = vld [vmem:[%s1589 + $0xc] sm:$0xf]
    %v1594 = vld [vmem:[%s1589 + $0x10] sm:$0xf]
    %v1595 = vld [vmem:[%s1589 + $0x14] sm:$0xf]
    %v1596 = vld [vmem:[%s1589 + $0x18] sm:$0xf]
    %v1597 = vld [vmem:[%s1589 + $0x1c] sm:$0xf]
    %v1598 = vrot.slane %v1121, 6
    %v1607 = vunpack.c.l.b16 %v1590
    %v1608 = vunpack.c.l.b16 %v1591
    %v1609 = vunpack.c.l.b16 %v1592
    %v1610 = vunpack.c.l.b16 %v1593
    %v1611 = vunpack.c.l.b16 %v1594
    %v1612 = vunpack.c.l.b16 %v1595
    %v1613 = vunpack.c.l.b16 %v1596
    %v1614 = vunpack.c.l.b16 %v1597
    %v1615 = vpack.c.b16 %v1608, %v1607
    %v1616 = vpack.c.b16 %v1610, %v1609
    %v1617 = vpack.c.b16 %v1612, %v1611
    %v1618 = vpack.c.b16 %v1614, %v1613
    %v1624 = vsel %vm1166, %v1598, 0
    %1626 = vmatprep.subr.bf16.mxu0 0
    %1627 = vmatpush1.bf16.msra.mxu0 %v1615
    %1628 = vmatprep.subr.bf16.mxu0 0
    %1629 = vmatpush1.bf16.msra.mxu0 %v1616
    %1630 = vmatprep.subr.bf16.mxu0 0
    %1631 = vmatpush1.bf16.msra.mxu0 %v1617
    %1632 = vmatprep.subr.bf16.mxu0 0
    %1633 = vmatpush1.bf16.msra.mxu0 %v1618
    %1634 = vmatprep.subr.bf16.mxu0 0
    %1635 = vmatpush1.bf16.msra.mxu0 0
    %1636 = vmatprep.subr.bf16.mxu0 0
    %1637 = vmatpush1.bf16.msra.mxu0 0
    %1638 = vmatprep.subr.bf16.mxu0 0
    %1639 = vmatpush1.bf16.msra.mxu0 0
    %1640 = vmatprep.subr.bf16.mxu0 0
    %1641 = vmatpush1.bf16.msra.mxu0 0
    %1642 = vmatprep.subr.bf16.mxu0 0
    %1643 = vmatpush1.bf16.msra.mxu0 0
    %1644 = vmatprep.subr.bf16.mxu0 0
    %1645 = vmatpush1.bf16.msra.mxu0 0
    %1646 = vmatprep.subr.bf16.mxu0 0
    %1647 = vmatpush1.bf16.msra.mxu0 0
    %1648 = vmatprep.subr.bf16.mxu0 0
    %1649 = vmatpush1.bf16.msra.mxu0 0
    %1650 = vmatprep.subr.bf16.mxu0 0
    %1651 = vmatpush1.bf16.msra.mxu0 0
    %1652 = vmatprep.subr.bf16.mxu0 0
    %1653 = vmatpush1.bf16.msra.mxu0 0
    %1654 = vmatprep.subr.bf16.mxu0 0
    %1655 = vmatpush1.bf16.msra.mxu0 0
    %1656 = vmatprep.subr.bf16.mxu0 0
    %1657 = vmatpush1.bf16.msra.mxu0 0
    %1658 = vmatprep.mubr.bf16.mxu0 0
    %1659 = vmatmul.mubr.bf16.gmra.mrb[0].mxu0 %v1624
    %v1660 = vpop.f32.mrb[0].mxu0
    %v1661 = vadd.f32 0.0, %v1660
    %v1662 = vpop.f32.mrb[0].mxu0
    %v1663 = vpop.f32.mrb[0].mxu0
    %v1664 = vpop.f32.mrb[0].mxu0
    %1665 = vdwg.mxu0
    %v1666 = vadd.f32 %v1588, %v1661
    %s1667 = scalar_lea.vmem [#allocation5], 224
    %v1668 = vld [vmem:[%s1667] sm:$0xf]
    %v1669 = vld [vmem:[%s1667 + $0x4] sm:$0xf]
    %v1670 = vld [vmem:[%s1667 + $0x8] sm:$0xf]
    %v1671 = vld [vmem:[%s1667 + $0xc] sm:$0xf]
    %v1672 = vld [vmem:[%s1667 + $0x10] sm:$0xf]
    %v1673 = vld [vmem:[%s1667 + $0x14] sm:$0xf]
    %v1674 = vld [vmem:[%s1667 + $0x18] sm:$0xf]
    %v1675 = vld [vmem:[%s1667 + $0x1c] sm:$0xf]
    %v1676 = vrot.slane %v1121, 7
    %v1685 = vunpack.c.l.b16 %v1668
    %v1686 = vunpack.c.l.b16 %v1669
    %v1687 = vunpack.c.l.b16 %v1670
    %v1688 = vunpack.c.l.b16 %v1671
    %v1689 = vunpack.c.l.b16 %v1672
    %v1690 = vunpack.c.l.b16 %v1673
    %v1691 = vunpack.c.l.b16 %v1674
    %v1692 = vunpack.c.l.b16 %v1675
    %v1693 = vpack.c.b16 %v1686, %v1685
    %v1694 = vpack.c.b16 %v1688, %v1687
    %v1695 = vpack.c.b16 %v1690, %v1689
    %v1696 = vpack.c.b16 %v1692, %v1691
    %v1702 = vsel %vm1166, %v1676, 0
    %1704 = vmatprep.subr.bf16.mxu0 0
    %1705 = vmatpush1.bf16.msra.mxu0 %v1693
    %1706 = vmatprep.subr.bf16.mxu0 0
    %1707 = vmatpush1.bf16.msra.mxu0 %v1694
    %1708 = vmatprep.subr.bf16.mxu0 0
    %1709 = vmatpush1.bf16.msra.mxu0 %v1695
    %1710 = vmatprep.subr.bf16.mxu0 0
    %1711 = vmatpush1.bf16.msra.mxu0 %v1696
    %1712 = vmatprep.subr.bf16.mxu0 0
    %1713 = vmatpush1.bf16.msra.mxu0 0
    %1714 = vmatprep.subr.bf16.mxu0 0
    %1715 = vmatpush1.bf16.msra.mxu0 0
    %1716 = vmatprep.subr.bf16.mxu0 0
    %1717 = vmatpush1.bf16.msra.mxu0 0
    %1718 = vmatprep.subr.bf16.mxu0 0
    %1719 = vmatpush1.bf16.msra.mxu0 0
    %1720 = vmatprep.subr.bf16.mxu0 0
    %1721 = vmatpush1.bf16.msra.mxu0 0
    %1722 = vmatprep.subr.bf16.mxu0 0
    %1723 = vmatpush1.bf16.msra.mxu0 0
    %1724 = vmatprep.subr.bf16.mxu0 0
    %1725 = vmatpush1.bf16.msra.mxu0 0
    %1726 = vmatprep.subr.bf16.mxu0 0
    %1727 = vmatpush1.bf16.msra.mxu0 0
    %1728 = vmatprep.subr.bf16.mxu0 0
    %1729 = vmatpush1.bf16.msra.mxu0 0
    %1730 = vmatprep.subr.bf16.mxu0 0
    %1731 = vmatpush1.bf16.msra.mxu0 0
    %1732 = vmatprep.subr.bf16.mxu0 0
    %1733 = vmatpush1.bf16.msra.mxu0 0
    %1734 = vmatprep.subr.bf16.mxu0 0
    %1735 = vmatpush1.bf16.msra.mxu0 0
    %1736 = vmatprep.mubr.bf16.mxu0 0
    %1737 = vmatmul.mubr.bf16.gmra.mrb[0].mxu0 %v1702
    %v1738 = vpop.f32.mrb[0].mxu0
    %v1739 = vadd.f32 0.0, %v1738
    %v1740 = vpop.f32.mrb[0].mxu0
    %v1741 = vpop.f32.mrb[0].mxu0
    %v1742 = vpop.f32.mrb[0].mxu0
    %1743 = vdwg.mxu0
    %v1744 = vadd.f32 %v1666, %v1739
    %s1745 = scalar_lea.vmem [#allocation5], 256
    %v1746 = vld [vmem:[%s1745] sm:$0xf]
    %v1747 = vld [vmem:[%s1745 + $0x4] sm:$0xf]
    %v1748 = vld [vmem:[%s1745 + $0x8] sm:$0xf]
    %v1749 = vld [vmem:[%s1745 + $0xc] sm:$0xf]
    %v1750 = vld [vmem:[%s1745 + $0x10] sm:$0xf]
    %v1751 = vld [vmem:[%s1745 + $0x14] sm:$0xf]
    %v1752 = vld [vmem:[%s1745 + $0x18] sm:$0xf]
    %v1753 = vld [vmem:[%s1745 + $0x1c] sm:$0xf]
    %v1762 = vunpack.c.l.b16 %v1746
    %v1763 = vunpack.c.l.b16 %v1747
    %v1764 = vunpack.c.l.b16 %v1748
    %v1765 = vunpack.c.l.b16 %v1749
    %v1766 = vunpack.c.l.b16 %v1750
    %v1767 = vunpack.c.l.b16 %v1751
    %v1768 = vunpack.c.l.b16 %v1752
    %v1769 = vunpack.c.l.b16 %v1753
    %v1770 = vpack.c.b16 %v1763, %v1762
    %v1771 = vpack.c.b16 %v1765, %v1764
    %v1772 = vpack.c.b16 %v1767, %v1766
    %v1773 = vpack.c.b16 %v1769, %v1768
    %v1779 = vsel %vm1166, %v1122, 0
    %1781 = vmatprep.subr.bf16.mxu0 0
    %1782 = vmatpush1.bf16.msra.mxu0 %v1770
    %1783 = vmatprep.subr.bf16.mxu0 0
    %1784 = vmatpush1.bf16.msra.mxu0 %v1771
    %1785 = vmatprep.subr.bf16.mxu0 0
    %1786 = vmatpush1.bf16.msra.mxu0 %v1772
    %1787 = vmatprep.subr.bf16.mxu0 0
    %1788 = vmatpush1.bf16.msra.mxu0 %v1773
    %1789 = vmatprep.subr.bf16.mxu0 0
    %1790 = vmatpush1.bf16.msra.mxu0 0
    %1791 = vmatprep.subr.bf16.mxu0 0
    %1792 = vmatpush1.bf16.msra.mxu0 0
    %1793 = vmatprep.subr.bf16.mxu0 0
    %1794 = vmatpush1.bf16.msra.mxu0 0
    %1795 = vmatprep.subr.bf16.mxu0 0
    %1796 = vmatpush1.bf16.msra.mxu0 0
    %1797 = vmatprep.subr.bf16.mxu0 0
    %1798 = vmatpush1.bf16.msra.mxu0 0
    %1799 = vmatprep.subr.bf16.mxu0 0
    %1800 = vmatpush1.bf16.msra.mxu0 0
    %1801 = vmatprep.subr.bf16.mxu0 0
    %1802 = vmatpush1.bf16.msra.mxu0 0
    %1803 = vmatprep.subr.bf16.mxu0 0
    %1804 = vmatpush1.bf16.msra.mxu0 0
    %1805 = vmatprep.subr.bf16.mxu0 0
    %1806 = vmatpush1.bf16.msra.mxu0 0
    %1807 = vmatprep.subr.bf16.mxu0 0
    %1808 = vmatpush1.bf16.msra.mxu0 0
    %1809 = vmatprep.subr.bf16.mxu0 0
    %1810 = vmatpush1.bf16.msra.mxu0 0
    %1811 = vmatprep.subr.bf16.mxu0 0
    %1812 = vmatpush1.bf16.msra.mxu0 0
    %1813 = vmatprep.mubr.bf16.mxu0 0
    %1814 = vmatmul.mubr.bf16.gmra.mrb[0].mxu0 %v1779
    %v1815 = vpop.f32.mrb[0].mxu0
    %v1816 = vadd.f32 0.0, %v1815
    %v1817 = vpop.f32.mrb[0].mxu0
    %v1818 = vpop.f32.mrb[0].mxu0
    %v1819 = vpop.f32.mrb[0].mxu0
    %1820 = vdwg.mxu0
    %v1821 = vadd.f32 %v1744, %v1816
    %s1822 = scalar_lea.vmem [#allocation5], 288
    %v1823 = vld [vmem:[%s1822] sm:$0xf]
    %v1824 = vld [vmem:[%s1822 + $0x4] sm:$0xf]
    %v1825 = vld [vmem:[%s1822 + $0x8] sm:$0xf]
    %v1826 = vld [vmem:[%s1822 + $0xc] sm:$0xf]
    %v1827 = vld [vmem:[%s1822 + $0x10] sm:$0xf]
    %v1828 = vld [vmem:[%s1822 + $0x14] sm:$0xf]
    %v1829 = vld [vmem:[%s1822 + $0x18] sm:$0xf]
    %v1830 = vld [vmem:[%s1822 + $0x1c] sm:$0xf]
    %v1832 = vrot.slane %v1122, 1
    %v1841 = vunpack.c.l.b16 %v1823
    %v1842 = vunpack.c.l.b16 %v1824
    %v1843 = vunpack.c.l.b16 %v1825
    %v1844 = vunpack.c.l.b16 %v1826
    %v1845 = vunpack.c.l.b16 %v1827
    %v1846 = vunpack.c.l.b16 %v1828
    %v1847 = vunpack.c.l.b16 %v1829
    %v1848 = vunpack.c.l.b16 %v1830
    %v1849 = vpack.c.b16 %v1842, %v1841
    %v1850 = vpack.c.b16 %v1844, %v1843
    %v1851 = vpack.c.b16 %v1846, %v1845
    %v1852 = vpack.c.b16 %v1848, %v1847
    %v1858 = vsel %vm1166, %v1832, 0
    %1860 = vmatprep.subr.bf16.mxu0 0
    %1861 = vmatpush1.bf16.msra.mxu0 %v1849
    %1862 = vmatprep.subr.bf16.mxu0 0
    %1863 = vmatpush1.bf16.msra.mxu0 %v1850
    %1864 = vmatprep.subr.bf16.mxu0 0
    %1865 = vmatpush1.bf16.msra.mxu0 %v1851
    %1866 = vmatprep.subr.bf16.mxu0 0
    %1867 = vmatpush1.bf16.msra.mxu0 %v1852
    %1868 = vmatprep.subr.bf16.mxu0 0
    %1869 = vmatpush1.bf16.msra.mxu0 0
    %1870 = vmatprep.subr.bf16.mxu0 0
    %1871 = vmatpush1.bf16.msra.mxu0 0
    %1872 = vmatprep.subr.bf16.mxu0 0
    %1873 = vmatpush1.bf16.msra.mxu0 0
    %1874 = vmatprep.subr.bf16.mxu0 0
    %1875 = vmatpush1.bf16.msra.mxu0 0
    %1876 = vmatprep.subr.bf16.mxu0 0
    %1877 = vmatpush1.bf16.msra.mxu0 0
    %1878 = vmatprep.subr.bf16.mxu0 0
    %1879 = vmatpush1.bf16.msra.mxu0 0
    %1880 = vmatprep.subr.bf16.mxu0 0
    %1881 = vmatpush1.bf16.msra.mxu0 0
    %1882 = vmatprep.subr.bf16.mxu0 0
    %1883 = vmatpush1.bf16.msra.mxu0 0
    %1884 = vmatprep.subr.bf16.mxu0 0
    %1885 = vmatpush1.bf16.msra.mxu0 0
    %1886 = vmatprep.subr.bf16.mxu0 0
    %1887 = vmatpush1.bf16.msra.mxu0 0
    %1888 = vmatprep.subr.bf16.mxu0 0
    %1889 = vmatpush1.bf16.msra.mxu0 0
    %1890 = vmatprep.subr.bf16.mxu0 0
    %1891 = vmatpush1.bf16.msra.mxu0 0
    %1892 = vmatprep.mubr.bf16.mxu0 0
    %1893 = vmatmul.mubr.bf16.gmra.mrb[0].mxu0 %v1858
    %v1894 = vpop.f32.mrb[0].mxu0
    %v1895 = vadd.f32 0.0, %v1894
    %v1896 = vpop.f32.mrb[0].mxu0
    %v1897 = vpop.f32.mrb[0].mxu0
    %v1898 = vpop.f32.mrb[0].mxu0
    %1899 = vdwg.mxu0
    %v1900 = vadd.f32 %v1821, %v1895
    %s1901 = scalar_lea.vmem [#allocation5], 320
    %v1902 = vld [vmem:[%s1901] sm:$0xf]
    %v1903 = vld [vmem:[%s1901 + $0x4] sm:$0xf]
    %v1904 = vld [vmem:[%s1901 + $0x8] sm:$0xf]
    %v1905 = vld [vmem:[%s1901 + $0xc] sm:$0xf]
    %v1906 = vld [vmem:[%s1901 + $0x10] sm:$0xf]
    %v1907 = vld [vmem:[%s1901 + $0x14] sm:$0xf]
    %v1908 = vld [vmem:[%s1901 + $0x18] sm:$0xf]
    %v1909 = vld [vmem:[%s1901 + $0x1c] sm:$0xf]
    %v1910 = vrot.slane %v1122, 2
    %v1919 = vunpack.c.l.b16 %v1902
    %v1920 = vunpack.c.l.b16 %v1903
    %v1921 = vunpack.c.l.b16 %v1904
    %v1922 = vunpack.c.l.b16 %v1905
    %v1923 = vunpack.c.l.b16 %v1906
    %v1924 = vunpack.c.l.b16 %v1907
    %v1925 = vunpack.c.l.b16 %v1908
    %v1926 = vunpack.c.l.b16 %v1909
    %v1927 = vpack.c.b16 %v1920, %v1919
    %v1928 = vpack.c.b16 %v1922, %v1921
    %v1929 = vpack.c.b16 %v1924, %v1923
    %v1930 = vpack.c.b16 %v1926, %v1925
    %v1936 = vsel %vm1166, %v1910, 0
    %1938 = vmatprep.subr.bf16.mxu0 0
    %1939 = vmatpush1.bf16.msra.mxu0 %v1927
    %1940 = vmatprep.subr.bf16.mxu0 0
    %1941 = vmatpush1.bf16.msra.mxu0 %v1928
    %1942 = vmatprep.subr.bf16.mxu0 0
    %1943 = vmatpush1.bf16.msra.mxu0 %v1929
    %1944 = vmatprep.subr.bf16.mxu0 0
    %1945 = vmatpush1.bf16.msra.mxu0 %v1930
    %1946 = vmatprep.subr.bf16.mxu0 0
    %1947 = vmatpush1.bf16.msra.mxu0 0
    %1948 = vmatprep.subr.bf16.mxu0 0
    %1949 = vmatpush1.bf16.msra.mxu0 0
    %1950 = vmatprep.subr.bf16.mxu0 0
    %1951 = vmatpush1.bf16.msra.mxu0 0
    %1952 = vmatprep.subr.bf16.mxu0 0
    %1953 = vmatpush1.bf16.msra.mxu0 0
    %1954 = vmatprep.subr.bf16.mxu0 0
    %1955 = vmatpush1.bf16.msra.mxu0 0
    %1956 = vmatprep.subr.bf16.mxu0 0
    %1957 = vmatpush1.bf16.msra.mxu0 0
    %1958 = vmatprep.subr.bf16.mxu0 0
    %1959 = vmatpush1.bf16.msra.mxu0 0
    %1960 = vmatprep.subr.bf16.mxu0 0
    %1961 = vmatpush1.bf16.msra.mxu0 0
    %1962 = vmatprep.subr.bf16.mxu0 0
    %1963 = vmatpush1.bf16.msra.mxu0 0
    %1964 = vmatprep.subr.bf16.mxu0 0
    %1965 = vmatpush1.bf16.msra.mxu0 0
    %1966 = vmatprep.subr.bf16.mxu0 0
    %1967 = vmatpush1.bf16.msra.mxu0 0
    %1968 = vmatprep.subr.bf16.mxu0 0
    %1969 = vmatpush1.bf16.msra.mxu0 0
    %1970 = vmatprep.mubr.bf16.mxu0 0
    %1971 = vmatmul.mubr.bf16.gmra.mrb[0].mxu0 %v1936
    %v1972 = vpop.f32.mrb[0].mxu0
    %v1973 = vadd.f32 0.0, %v1972
    %v1974 = vpop.f32.mrb[0].mxu0
    %v1975 = vpop.f32.mrb[0].mxu0
    %v1976 = vpop.f32.mrb[0].mxu0
    %1977 = vdwg.mxu0
    %v1978 = vadd.f32 %v1900, %v1973
    %s1979 = scalar_lea.vmem [#allocation5], 352
    %v1980 = vld [vmem:[%s1979] sm:$0xf]
    %v1981 = vld [vmem:[%s1979 + $0x4] sm:$0xf]
    %v1982 = vld [vmem:[%s1979 + $0x8] sm:$0xf]
    %v1983 = vld [vmem:[%s1979 + $0xc] sm:$0xf]
    %v1984 = vld [vmem:[%s1979 + $0x10] sm:$0xf]
    %v1985 = vld [vmem:[%s1979 + $0x14] sm:$0xf]
    %v1986 = vld [vmem:[%s1979 + $0x18] sm:$0xf]
    %v1987 = vld [vmem:[%s1979 + $0x1c] sm:$0xf]
    %v1988 = vrot.slane %v1122, 3
    %v1997 = vunpack.c.l.b16 %v1980
    %v1998 = vunpack.c.l.b16 %v1981
    %v1999 = vunpack.c.l.b16 %v1982
    %v2000 = vunpack.c.l.b16 %v1983
    %v2001 = vunpack.c.l.b16 %v1984
    %v2002 = vunpack.c.l.b16 %v1985
    %v2003 = vunpack.c.l.b16 %v1986
    %v2004 = vunpack.c.l.b16 %v1987
    %v2005 = vpack.c.b16 %v1998, %v1997
    %v2006 = vpack.c.b16 %v2000, %v1999
    %v2007 = vpack.c.b16 %v2002, %v2001
    %v2008 = vpack.c.b16 %v2004, %v2003
    %v2014 = vsel %vm1166, %v1988, 0
    %2016 = vmatprep.subr.bf16.mxu0 0
    %2017 = vmatpush1.bf16.msra.mxu0 %v2005
    %2018 = vmatprep.subr.bf16.mxu0 0
    %2019 = vmatpush1.bf16.msra.mxu0 %v2006
    %2020 = vmatprep.subr.bf16.mxu0 0
    %2021 = vmatpush1.bf16.msra.mxu0 %v2007
    %2022 = vmatprep.subr.bf16.mxu0 0
    %2023 = vmatpush1.bf16.msra.mxu0 %v2008
    %2024 = vmatprep.subr.bf16.mxu0 0
    %2025 = vmatpush1.bf16.msra.mxu0 0
    %2026 = vmatprep.subr.bf16.mxu0 0
    %2027 = vmatpush1.bf16.msra.mxu0 0
    %2028 = vmatprep.subr.bf16.mxu0 0
    %2029 = vmatpush1.bf16.msra.mxu0 0
    %2030 = vmatprep.subr.bf16.mxu0 0
    %2031 = vmatpush1.bf16.msra.mxu0 0
    %2032 = vmatprep.subr.bf16.mxu0 0
    %2033 = vmatpush1.bf16.msra.mxu0 0
    %2034 = vmatprep.subr.bf16.mxu0 0
    %2035 = vmatpush1.bf16.msra.mxu0 0
    %2036 = vmatprep.subr.bf16.mxu0 0
    %2037 = vmatpush1.bf16.msra.mxu0 0
    %2038 = vmatprep.subr.bf16.mxu0 0
    %2039 = vmatpush1.bf16.msra.mxu0 0
    %2040 = vmatprep.subr.bf16.mxu0 0
    %2041 = vmatpush1.bf16.msra.mxu0 0
    %2042 = vmatprep.subr.bf16.mxu0 0
    %2043 = vmatpush1.bf16.msra.mxu0 0
    %2044 = vmatprep.subr.bf16.mxu0 0
    %2045 = vmatpush1.bf16.msra.mxu0 0
    %2046 = vmatprep.subr.bf16.mxu0 0
    %2047 = vmatpush1.bf16.msra.mxu0 0
    %2048 = vmatprep.mubr.bf16.mxu0 0
    %2049 = vmatmul.mubr.bf16.gmra.mrb[0].mxu0 %v2014
    %v2050 = vpop.f32.mrb[0].mxu0
    %v2051 = vadd.f32 0.0, %v2050
    %v2052 = vpop.f32.mrb[0].mxu0
    %v2053 = vpop.f32.mrb[0].mxu0
    %v2054 = vpop.f32.mrb[0].mxu0
    %2055 = vdwg.mxu0
    %v2056 = vadd.f32 %v1978, %v2051
    %s2057 = scalar_lea.vmem [#allocation5], 384
    %v2058 = vld [vmem:[%s2057] sm:$0xf]
    %v2059 = vld [vmem:[%s2057 + $0x4] sm:$0xf]
    %v2060 = vld [vmem:[%s2057 + $0x8] sm:$0xf]
    %v2061 = vld [vmem:[%s2057 + $0xc] sm:$0xf]
    %v2062 = vld [vmem:[%s2057 + $0x10] sm:$0xf]
    %v2063 = vld [vmem:[%s2057 + $0x14] sm:$0xf]
    %v2064 = vld [vmem:[%s2057 + $0x18] sm:$0xf]
    %v2065 = vld [vmem:[%s2057 + $0x1c] sm:$0xf]
    %v2066 = vrot.slane %v1122, 4
    %v2075 = vunpack.c.l.b16 %v2058
    %v2076 = vunpack.c.l.b16 %v2059
    %v2077 = vunpack.c.l.b16 %v2060
    %v2078 = vunpack.c.l.b16 %v2061
    %v2079 = vunpack.c.l.b16 %v2062
    %v2080 = vunpack.c.l.b16 %v2063
    %v2081 = vunpack.c.l.b16 %v2064
    %v2082 = vunpack.c.l.b16 %v2065
    %v2083 = vpack.c.b16 %v2076, %v2075
    %v2084 = vpack.c.b16 %v2078, %v2077
    %v2085 = vpack.c.b16 %v2080, %v2079
    %v2086 = vpack.c.b16 %v2082, %v2081
    %v2092 = vsel %vm1166, %v2066, 0
    %2094 = vmatprep.subr.bf16.mxu0 0
    %2095 = vmatpush1.bf16.msra.mxu0 %v2083
    %2096 = vmatprep.subr.bf16.mxu0 0
    %2097 = vmatpush1.bf16.msra.mxu0 %v2084
    %2098 = vmatprep.subr.bf16.mxu0 0
    %2099 = vmatpush1.bf16.msra.mxu0 %v2085
    %2100 = vmatprep.subr.bf16.mxu0 0
    %2101 = vmatpush1.bf16.msra.mxu0 %v2086
    %2102 = vmatprep.subr.bf16.mxu0 0
    %2103 = vmatpush1.bf16.msra.mxu0 0
    %2104 = vmatprep.subr.bf16.mxu0 0
    %2105 = vmatpush1.bf16.msra.mxu0 0
    %2106 = vmatprep.subr.bf16.mxu0 0
    %2107 = vmatpush1.bf16.msra.mxu0 0
    %2108 = vmatprep.subr.bf16.mxu0 0
    %2109 = vmatpush1.bf16.msra.mxu0 0
    %2110 = vmatprep.subr.bf16.mxu0 0
    %2111 = vmatpush1.bf16.msra.mxu0 0
    %2112 = vmatprep.subr.bf16.mxu0 0
    %2113 = vmatpush1.bf16.msra.mxu0 0
    %2114 = vmatprep.subr.bf16.mxu0 0
    %2115 = vmatpush1.bf16.msra.mxu0 0
    %2116 = vmatprep.subr.bf16.mxu0 0
    %2117 = vmatpush1.bf16.msra.mxu0 0
    %2118 = vmatprep.subr.bf16.mxu0 0
    %2119 = vmatpush1.bf16.msra.mxu0 0
    %2120 = vmatprep.subr.bf16.mxu0 0
    %2121 = vmatpush1.bf16.msra.mxu0 0
    %2122 = vmatprep.subr.bf16.mxu0 0
    %2123 = vmatpush1.bf16.msra.mxu0 0
    %2124 = vmatprep.subr.bf16.mxu0 0
    %2125 = vmatpush1.bf16.msra.mxu0 0
    %2126 = vmatprep.mubr.bf16.mxu0 0
    %2127 = vmatmul.mubr.bf16.gmra.mrb[0].mxu0 %v2092
    %v2128 = vpop.f32.mrb[0].mxu0
    %v2129 = vadd.f32 0.0, %v2128
    %v2130 = vpop.f32.mrb[0].mxu0
    %v2131 = vpop.f32.mrb[0].mxu0
    %v2132 = vpop.f32.mrb[0].mxu0
    %2133 = vdwg.mxu0
    %v2134 = vadd.f32 %v2056, %v2129
    %s2135 = scalar_lea.vmem [#allocation5], 416
    %v2136 = vld [vmem:[%s2135] sm:$0xf]
    %v2137 = vld [vmem:[%s2135 + $0x4] sm:$0xf]
    %v2138 = vld [vmem:[%s2135 + $0x8] sm:$0xf]
    %v2139 = vld [vmem:[%s2135 + $0xc] sm:$0xf]
    %v2140 = vld [vmem:[%s2135 + $0x10] sm:$0xf]
    %v2141 = vld [vmem:[%s2135 + $0x14] sm:$0xf]
    %v2142 = vld [vmem:[%s2135 + $0x18] sm:$0xf]
    %v2143 = vld [vmem:[%s2135 + $0x1c] sm:$0xf]
    %v2144 = vrot.slane %v1122, 5
    %v2153 = vunpack.c.l.b16 %v2136
    %v2154 = vunpack.c.l.b16 %v2137
    %v2155 = vunpack.c.l.b16 %v2138
    %v2156 = vunpack.c.l.b16 %v2139
    %v2157 = vunpack.c.l.b16 %v2140
    %v2158 = vunpack.c.l.b16 %v2141
    %v2159 = vunpack.c.l.b16 %v2142
    %v2160 = vunpack.c.l.b16 %v2143
    %v2161 = vpack.c.b16 %v2154, %v2153
    %v2162 = vpack.c.b16 %v2156, %v2155
    %v2163 = vpack.c.b16 %v2158, %v2157
    %v2164 = vpack.c.b16 %v2160, %v2159
    %v2170 = vsel %vm1166, %v2144, 0
    %2172 = vmatprep.subr.bf16.mxu0 0
    %2173 = vmatpush1.bf16.msra.mxu0 %v2161
    %2174 = vmatprep.subr.bf16.mxu0 0
    %2175 = vmatpush1.bf16.msra.mxu0 %v2162
    %2176 = vmatprep.subr.bf16.mxu0 0
    %2177 = vmatpush1.bf16.msra.mxu0 %v2163
    %2178 = vmatprep.subr.bf16.mxu0 0
    %2179 = vmatpush1.bf16.msra.mxu0 %v2164
    %2180 = vmatprep.subr.bf16.mxu0 0
    %2181 = vmatpush1.bf16.msra.mxu0 0
    %2182 = vmatprep.subr.bf16.mxu0 0
    %2183 = vmatpush1.bf16.msra.mxu0 0
    %2184 = vmatprep.subr.bf16.mxu0 0
    %2185 = vmatpush1.bf16.msra.mxu0 0
    %2186 = vmatprep.subr.bf16.mxu0 0
    %2187 = vmatpush1.bf16.msra.mxu0 0
    %2188 = vmatprep.subr.bf16.mxu0 0
    %2189 = vmatpush1.bf16.msra.mxu0 0
    %2190 = vmatprep.subr.bf16.mxu0 0
    %2191 = vmatpush1.bf16.msra.mxu0 0
    %2192 = vmatprep.subr.bf16.mxu0 0
    %2193 = vmatpush1.bf16.msra.mxu0 0
    %2194 = vmatprep.subr.bf16.mxu0 0
    %2195 = vmatpush1.bf16.msra.mxu0 0
    %2196 = vmatprep.subr.bf16.mxu0 0
    %2197 = vmatpush1.bf16.msra.mxu0 0
    %2198 = vmatprep.subr.bf16.mxu0 0
    %2199 = vmatpush1.bf16.msra.mxu0 0
    %2200 = vmatprep.subr.bf16.mxu0 0
    %2201 = vmatpush1.bf16.msra.mxu0 0
    %2202 = vmatprep.subr.bf16.mxu0 0
    %2203 = vmatpush1.bf16.msra.mxu0 0
    %2204 = vmatprep.mubr.bf16.mxu0 0
    %2205 = vmatmul.mubr.bf16.gmra.mrb[0].mxu0 %v2170
    %v2206 = vpop.f32.mrb[0].mxu0
    %v2207 = vadd.f32 0.0, %v2206
    %v2208 = vpop.f32.mrb[0].mxu0
    %v2209 = vpop.f32.mrb[0].mxu0
    %v2210 = vpop.f32.mrb[0].mxu0
    %2211 = vdwg.mxu0
    %v2212 = vadd.f32 %v2134, %v2207
    %s2213 = scalar_lea.vmem [#allocation5], 448
    %v2214 = vld [vmem:[%s2213] sm:$0xf]
    %v2215 = vld [vmem:[%s2213 + $0x4] sm:$0xf]
    %v2216 = vld [vmem:[%s2213 + $0x8] sm:$0xf]
    %v2217 = vld [vmem:[%s2213 + $0xc] sm:$0xf]
    %v2218 = vld [vmem:[%s2213 + $0x10] sm:$0xf]
    %v2219 = vld [vmem:[%s2213 + $0x14] sm:$0xf]
    %v2220 = vld [vmem:[%s2213 + $0x18] sm:$0xf]
    %v2221 = vld [vmem:[%s2213 + $0x1c] sm:$0xf]
    %v2222 = vrot.slane %v1122, 6
    %v2231 = vunpack.c.l.b16 %v2214
    %v2232 = vunpack.c.l.b16 %v2215
    %v2233 = vunpack.c.l.b16 %v2216
    %v2234 = vunpack.c.l.b16 %v2217
    %v2235 = vunpack.c.l.b16 %v2218
    %v2236 = vunpack.c.l.b16 %v2219
    %v2237 = vunpack.c.l.b16 %v2220
    %v2238 = vunpack.c.l.b16 %v2221
    %v2239 = vpack.c.b16 %v2232, %v2231
    %v2240 = vpack.c.b16 %v2234, %v2233
    %v2241 = vpack.c.b16 %v2236, %v2235
    %v2242 = vpack.c.b16 %v2238, %v2237
    %v2248 = vsel %vm1166, %v2222, 0
    %2250 = vmatprep.subr.bf16.mxu0 0
    %2251 = vmatpush1.bf16.msra.mxu0 %v2239
    %2252 = vmatprep.subr.bf16.mxu0 0
    %2253 = vmatpush1.bf16.msra.mxu0 %v2240
    %2254 = vmatprep.subr.bf16.mxu0 0
    %2255 = vmatpush1.bf16.msra.mxu0 %v2241
    %2256 = vmatprep.subr.bf16.mxu0 0
    %2257 = vmatpush1.bf16.msra.mxu0 %v2242
    %2258 = vmatprep.subr.bf16.mxu0 0
    %2259 = vmatpush1.bf16.msra.mxu0 0
    %2260 = vmatprep.subr.bf16.mxu0 0
    %2261 = vmatpush1.bf16.msra.mxu0 0
    %2262 = vmatprep.subr.bf16.mxu0 0
    %2263 = vmatpush1.bf16.msra.mxu0 0
    %2264 = vmatprep.subr.bf16.mxu0 0
    %2265 = vmatpush1.bf16.msra.mxu0 0
    %2266 = vmatprep.subr.bf16.mxu0 0
    %2267 = vmatpush1.bf16.msra.mxu0 0
    %2268 = vmatprep.subr.bf16.mxu0 0
    %2269 = vmatpush1.bf16.msra.mxu0 0
    %2270 = vmatprep.subr.bf16.mxu0 0
    %2271 = vmatpush1.bf16.msra.mxu0 0
    %2272 = vmatprep.subr.bf16.mxu0 0
    %2273 = vmatpush1.bf16.msra.mxu0 0
    %2274 = vmatprep.subr.bf16.mxu0 0
    %2275 = vmatpush1.bf16.msra.mxu0 0
    %2276 = vmatprep.subr.bf16.mxu0 0
    %2277 = vmatpush1.bf16.msra.mxu0 0
    %2278 = vmatprep.subr.bf16.mxu0 0
    %2279 = vmatpush1.bf16.msra.mxu0 0
    %2280 = vmatprep.subr.bf16.mxu0 0
    %2281 = vmatpush1.bf16.msra.mxu0 0
    %2282 = vmatprep.mubr.bf16.mxu0 0
    %2283 = vmatmul.mubr.bf16.gmra.mrb[0].mxu0 %v2248
    %v2284 = vpop.f32.mrb[0].mxu0
    %v2285 = vadd.f32 0.0, %v2284
    %v2286 = vpop.f32.mrb[0].mxu0
    %v2287 = vpop.f32.mrb[0].mxu0
    %v2288 = vpop.f32.mrb[0].mxu0
    %2289 = vdwg.mxu0
    %v2290 = vadd.f32 %v2212, %v2285
    %s2291 = scalar_lea.vmem [#allocation5], 480
    %v2292 = vld [vmem:[%s2291] sm:$0xf]
    %v2293 = vld [vmem:[%s2291 + $0x4] sm:$0xf]
    %v2294 = vld [vmem:[%s2291 + $0x8] sm:$0xf]
    %v2295 = vld [vmem:[%s2291 + $0xc] sm:$0xf]
    %v2296 = vld [vmem:[%s2291 + $0x10] sm:$0xf]
    %v2297 = vld [vmem:[%s2291 + $0x14] sm:$0xf]
    %v2298 = vld [vmem:[%s2291 + $0x18] sm:$0xf]
    %v2299 = vld [vmem:[%s2291 + $0x1c] sm:$0xf]
    %v2300 = vrot.slane %v1122, 7
    %v2309 = vunpack.c.l.b16 %v2292
    %v2310 = vunpack.c.l.b16 %v2293
    %v2311 = vunpack.c.l.b16 %v2294
    %v2312 = vunpack.c.l.b16 %v2295
    %v2313 = vunpack.c.l.b16 %v2296
    %v2314 = vunpack.c.l.b16 %v2297
    %v2315 = vunpack.c.l.b16 %v2298
    %v2316 = vunpack.c.l.b16 %v2299
    %v2317 = vpack.c.b16 %v2310, %v2309
    %v2318 = vpack.c.b16 %v2312, %v2311
    %v2319 = vpack.c.b16 %v2314, %v2313
    %v2320 = vpack.c.b16 %v2316, %v2315
    %v2326 = vsel %vm1166, %v2300, 0
    %2328 = vmatprep.subr.bf16.mxu0 0
    %2329 = vmatpush1.bf16.msra.mxu0 %v2317
    %2330 = vmatprep.subr.bf16.mxu0 0
    %2331 = vmatpush1.bf16.msra.mxu0 %v2318
    %2332 = vmatprep.subr.bf16.mxu0 0
    %2333 = vmatpush1.bf16.msra.mxu0 %v2319
    %2334 = vmatprep.subr.bf16.mxu0 0
    %2335 = vmatpush1.bf16.msra.mxu0 %v2320
    %2336 = vmatprep.subr.bf16.mxu0 0
    %2337 = vmatpush1.bf16.msra.mxu0 0
    %2338 = vmatprep.subr.bf16.mxu0 0
    %2339 = vmatpush1.bf16.msra.mxu0 0
    %2340 = vmatprep.subr.bf16.mxu0 0
    %2341 = vmatpush1.bf16.msra.mxu0 0
    %2342 = vmatprep.subr.bf16.mxu0 0
    %2343 = vmatpush1.bf16.msra.mxu0 0
    %2344 = vmatprep.subr.bf16.mxu0 0
    %2345 = vmatpush1.bf16.msra.mxu0 0
    %2346 = vmatprep.subr.bf16.mxu0 0
    %2347 = vmatpush1.bf16.msra.mxu0 0
    %2348 = vmatprep.subr.bf16.mxu0 0
    %2349 = vmatpush1.bf16.msra.mxu0 0
    %2350 = vmatprep.subr.bf16.mxu0 0
    %2351 = vmatpush1.bf16.msra.mxu0 0
    %2352 = vmatprep.subr.bf16.mxu0 0
    %2353 = vmatpush1.bf16.msra.mxu0 0
    %2354 = vmatprep.subr.bf16.mxu0 0
    %2355 = vmatpush1.bf16.msra.mxu0 0
    %2356 = vmatprep.subr.bf16.mxu0 0
    %2357 = vmatpush1.bf16.msra.mxu0 0
    %2358 = vmatprep.subr.bf16.mxu0 0
    %2359 = vmatpush1.bf16.msra.mxu0 0
    %2360 = vmatprep.mubr.bf16.mxu0 0
    %2361 = vmatmul.mubr.bf16.gmra.mrb[0].mxu0 %v2326
    %v2362 = vpop.f32.mrb[0].mxu0
    %v2363 = vadd.f32 0.0, %v2362
    %v2364 = vpop.f32.mrb[0].mxu0
    %v2365 = vpop.f32.mrb[0].mxu0
    %v2366 = vpop.f32.mrb[0].mxu0
    %2367 = vdwg.mxu0
    %v2368 = vadd.f32 %v2290, %v2363
    %v2370 = vlaneseq
    %v2371 = vshrl.u32 %v2370, 7
    %v2372 = vsub.s32 0, %v2371
    %v2373 = vrot.slane %v72, %v2372
    %v2375 = vadd.f32 %v2368, %v2373
    %v2376 = vmax.f32 %v2375, 0.0
    %v2377 = vpack.c.bf16 %v2376, %v2376
    %v2378 = vld [vmem:[#allocation7] sm:$0xf]
    %v2379 = vld [vmem:[#allocation7 + $0x4] sm:$0xf]
    %v2380 = vld [vmem:[#allocation7 + $0x8] sm:$0xf]
    %v2381 = vld [vmem:[#allocation7 + $0xc] sm:$0xf]
    %v2382 = vld [vmem:[#allocation7 + $0x10] sm:$0xf]
    %v2383 = vld [vmem:[#allocation7 + $0x14] sm:$0xf]
    %v2384 = vld [vmem:[#allocation7 + $0x18] sm:$0xf]
    %v2385 = vld [vmem:[#allocation7 + $0x1c] sm:$0xf]
    %v2386 = vld [vmem:[#allocation7 + $0x20] sm:$0xf]
    %v2387 = vld [vmem:[#allocation7 + $0x24] sm:$0xf]
    %v2388 = vld [vmem:[#allocation7 + $0x28] sm:$0xf]
    %v2389 = vld [vmem:[#allocation7 + $0x2c] sm:$0xf]
    %v2390 = vld [vmem:[#allocation7 + $0x30] sm:$0xf]
    %v2391 = vld [vmem:[#allocation7 + $0x34] sm:$0xf]
    %v2392 = vld [vmem:[#allocation7 + $0x38] sm:$0xf]
    %v2393 = vld [vmem:[#allocation7 + $0x3c] sm:$0xf]
    %v2395 = vlaneseq
    %v2396 = vshrl.u32 %v2395, 7
    %v2397 = vsub.s32 0, %v2396
    %v2398 = vrot.slane %v73, %v2397
    %v2416 = vunpack.c.l.b16 %v2378
    %v2417 = vunpack.c.l.b16 %v2379
    %v2418 = vunpack.c.l.b16 %v2380
    %v2419 = vunpack.c.l.b16 %v2381
    %v2420 = vunpack.c.l.b16 %v2382
    %v2421 = vunpack.c.l.b16 %v2383
    %v2422 = vunpack.c.l.b16 %v2384
    %v2423 = vunpack.c.l.b16 %v2385
    %v2424 = vunpack.c.l.b16 %v2386
    %v2425 = vunpack.c.l.b16 %v2387
    %v2426 = vunpack.c.l.b16 %v2388
    %v2427 = vunpack.c.l.b16 %v2389
    %v2428 = vunpack.c.l.b16 %v2390
    %v2429 = vunpack.c.l.b16 %v2391
    %v2430 = vunpack.c.l.b16 %v2392
    %v2431 = vunpack.c.l.b16 %v2393
    %v2432 = vpack.c.b16 %v2417, %v2416
    %v2433 = vpack.c.b16 %v2419, %v2418
    %v2434 = vpack.c.b16 %v2421, %v2420
    %v2435 = vpack.c.b16 %v2423, %v2422
    %v2436 = vpack.c.b16 %v2425, %v2424
    %v2437 = vpack.c.b16 %v2427, %v2426
    %v2438 = vpack.c.b16 %v2429, %v2428
    %v2439 = vpack.c.b16 %v2431, %v2430
    %2448 = vmatprep.subr.bf16.mxu0 0
    %2449 = vmatpush1.bf16.msra.mxu0 %v2432
    %2450 = vmatprep.subr.bf16.mxu0 0
    %2451 = vmatpush1.bf16.msra.mxu0 %v2433
    %2452 = vmatprep.subr.bf16.mxu0 0
    %2453 = vmatpush1.bf16.msra.mxu0 %v2434
    %2454 = vmatprep.subr.bf16.mxu0 0
    %2455 = vmatpush1.bf16.msra.mxu0 %v2435
    %2456 = vmatprep.subr.bf16.mxu0 0
    %2457 = vmatpush1.bf16.msra.mxu0 %v2436
    %2458 = vmatprep.subr.bf16.mxu0 0
    %2459 = vmatpush1.bf16.msra.mxu0 %v2437
    %2460 = vmatprep.subr.bf16.mxu0 0
    %2461 = vmatpush1.bf16.msra.mxu0 %v2438
    %2462 = vmatprep.subr.bf16.mxu0 0
    %2463 = vmatpush1.bf16.msra.mxu0 %v2439
    %2464 = vmatprep.subr.bf16.mxu0 0
    %2465 = vmatpush1.bf16.msra.mxu0 0
    %2466 = vmatprep.subr.bf16.mxu0 0
    %2467 = vmatpush1.bf16.msra.mxu0 0
    %2468 = vmatprep.subr.bf16.mxu0 0
    %2469 = vmatpush1.bf16.msra.mxu0 0
    %2470 = vmatprep.subr.bf16.mxu0 0
    %2471 = vmatpush1.bf16.msra.mxu0 0
    %2472 = vmatprep.subr.bf16.mxu0 0
    %2473 = vmatpush1.bf16.msra.mxu0 0
    %2474 = vmatprep.subr.bf16.mxu0 0
    %2475 = vmatpush1.bf16.msra.mxu0 0
    %2476 = vmatprep.subr.bf16.mxu0 0
    %2477 = vmatpush1.bf16.msra.mxu0 0
    %2478 = vmatprep.subr.bf16.mxu0 0
    %2479 = vmatpush1.bf16.msra.mxu0 0
    %2480 = vmatprep.mubr.bf16.mxu0 0
    %2481 = vmatmul.mubr.bf16.gmra.mrb[0].mxu0 %v2377
    %v2482 = vpop.f32.mrb[0].mxu0
    %v2483 = vadd.f32 %v2398, %v2482
    %v2484 = vpop.f32.mrb[0].mxu0
    %v2485 = vpop.f32.mrb[0].mxu0
    %v2486 = vpop.f32.mrb[0].mxu0
    %2487 = vdwg.mxu0
    %2488 = vst [vmem:[#allocation8] sm:$0x3] %v2483
    // Predicated region
    $region42: #{tpu_custom_call.1} parent=1 // pred_check
      _
    $region43: #{tpu_custom_call.1} parent=1 // pred_check_branch
      %2490 = sbr.rel (0) target = $region45
    $region44: #{tpu_custom_call.1} parent=1 // pred_region
      %s2492 = ssub.s32 32, 32
      %2493 = vsyncadd [#allocation4], %s2492
      %s2495 = sshll.u32 [#allocation8], 4
      %s2496 = int_to_ptr.vmem [resolvable:$true] %s2495
      %2498 = dma.vmem_to_hbm [thread:$0]  %s2496, 32, %s7, [#allocation4]
    $region45: #{tpu_custom_call.1} parent=1 // pred_fallthru
      _
    // Predicated region
    $region46: #{tpu_custom_call.1} parent=1 // pred_check
      _
    $region47: #{tpu_custom_call.1} parent=1 // pred_check_branch
      %2500 = sbr.rel (0) target = $region49
    $region48: #{tpu_custom_call.1} parent=1 // pred_region
      %2501 = dma.done [#allocation4], 32
    $region49: #{tpu_custom_call.1} parent=1 // pred_fallthru
      _
    %2502 = vsyncpa [#allocation3], 1
    %2503 = vsyncpa [#allocation6], 1
    %2504 = vsyncpa [#allocation4], 1

</llo_original>
